<compile_context>
chip_gen: v6e
topology: v6e:2x2x1
jax: 0.10.0
libtpu: 0.0.40
codegen_flags: <defaults>
</compile_context>

<pallas_src>
import functools
import numpy as np
import jax
import jax.numpy as jnp
from jax.experimental import pallas as pl
from jax.experimental.pallas import tpu as pltpu


# ----------------------------- glue: same-pad im2col -------------------------

def _same_pad_amount(size, k, stride):
    out = -(-size // stride)                       # ceil(size / stride)
    pad = max(0, (out - 1) * stride + k - size)
    lo = pad // 2
    return lo, pad - lo, out


def extract_patches_nchw(x, k, stride):
    """torch extract_image_patches(..., padding='same'): [B,C,H,W] -> [B, C*k*k, L]."""
    B, C, H, W = x.shape
    pt, pb, Ho = _same_pad_amount(H, k, stride)
    plft, prgt, Wo = _same_pad_amount(W, k, stride)
    xp = jnp.pad(x, ((0, 0), (0, 0), (pt, pb), (plft, prgt)))
    cols = []
    for dy in range(k):
        for dx in range(k):
            sl = xp[:, :, dy:dy + stride * (Ho - 1) + 1:stride,
                          dx:dx + stride * (Wo - 1) + 1:stride]
            cols.append(sl.reshape(B, C, Ho * Wo))
    out = jnp.stack(cols, axis=2)                  # [B, C, k*k, L]  (c, dy, dx) order
    return out.reshape(B, C * k * k, Ho * Wo), Ho, Wo


def _pick_tile(n, target, align):
    """Largest multiple of `align` that divides n and is <= target; n itself if none."""
    if n <= target:
        return n
    t = (target // align) * align
    while t >= align:
        if n % t == 0:
            return t
        t -= align
    return n


# ----------------------------- Pallas kernels --------------------------------

def _scores_kernel(x_ref, w_ref, n_ref, o_ref):
    # x_ref: (TP, CKp) im2col rows of the downsampled foreground tile.
    # w_ref: (CKp, L)  background 3x3 patches as columns (resident across P tiles).
    # n_ref: (1, L)    precomputed 1 / max(||w[:, l]||, 1e-4) (tiny side input).
    # o_ref: (TP, L)   scores s[p, l] = <x[p], w[l]> * n[l].
    o_ref[...] = jnp.dot(x_ref[...], w_ref[...],
                         preferred_element_type=jnp.float32) * n_ref[...]


def _fuse_kernel(sp_ref, o_ref):
    # eye(3) 'same' conv as a diagonal stencil on the zero-padded scores:
    #   out[i, j] = s[i, j] + s[i-1, j-1] + s[i+1, j+1]
    P, L = o_ref.shape
    o_ref[...] = (sp_ref[pl.ds(1, P), pl.ds(1, L)]
                  + sp_ref[pl.ds(0, P), pl.ds(0, L)]
                  + sp_ref[pl.ds(2, P), pl.ds(2, L)])


def _fuse_softmax_attend_kernel(s_ref, raw_ref, o_ref, prob_ref, *, scale, apply_fuse):
    # s_ref:   (P+2, L+2) padded scores if apply_fuse else (P, L) scores (resident).
    # raw_ref: (L, TM)    raw (un-normalized) background patch features.
    # o_ref:   (P, TM)    attention-weighted patch mix.
    # prob_ref:(P, L)     softmax probabilities, computed once per batch (mt == 0).
    @pl.when(pl.program_id(1) == 0)
    def _():
        P, L = prob_ref.shape
        if apply_fuse:
            s = (s_ref[pl.ds(1, P), pl.ds(1, L)]
                 + s_ref[pl.ds(0, P), pl.ds(0, L)]
                 + s_ref[pl.ds(2, P), pl.ds(2, L)])
        else:
            s = s_ref[...]
        s = s * jnp.float32(scale)
        m = jnp.max(s, axis=1, keepdims=True)                        # lane-axis reduce
        e = jnp.exp(s - m)                                           # EUP
        denom = jnp.sum(e, axis=1, keepdims=True)
        prob_ref[...] = e * pl.reciprocal(denom)                     # only (P,1) recips
    o_ref[...] = jnp.dot(prob_ref[...], raw_ref[...],
                         preferred_element_type=jnp.float32)


# ----------------------------- pallas_call wrappers ---------------------------

def scores_pallas(x_rows, w_cols, inv_nrm, tp):
    B, P, CKp = x_rows.shape
    L = w_cols.shape[2]
    return pl.pallas_call(
        _scores_kernel,
        out_shape=jax.ShapeDtypeStruct((B, P, L), jnp.float32),
        grid=(B, P // tp),
        in_specs=[pl.BlockSpec((None, tp, CKp), lambda bi, pi: (bi, pi, 0)),
                  pl.BlockSpec((None, CKp, L), lambda bi, pi: (bi, 0, 0)),
                  pl.BlockSpec((None, 1, L), lambda bi, pi: (bi, 0, 0))],
        out_specs=pl.BlockSpec((None, tp, L), lambda bi, pi: (bi, pi, 0)),
        compiler_params=pltpu.CompilerParams(
            dimension_semantics=("parallel", "parallel")),
    )(x_rows, w_cols, inv_nrm)


def fuse_pallas(sp):
    # sp: [B, P+2, L+2] zero-padded scores -> fused scores [B, P, L]
    B, Pp2, Lp2 = sp.shape
    P, L = Pp2 - 2, Lp2 - 2
    return pl.pallas_call(
        _fuse_kernel,
        out_shape=jax.ShapeDtypeStruct((B, P, L), jnp.float32),
        grid=(B,),
        in_specs=[pl.BlockSpec((None, Pp2, Lp2), lambda bi: (bi, 0, 0))],
        out_specs=pl.BlockSpec((None, P, L), lambda bi: (bi, 0, 0)),
        compiler_params=pltpu.CompilerParams(dimension_semantics=("parallel",)),
    )(sp)


def fuse_softmax_attend_pallas(s_in, raw, scale, apply_fuse, tm):
    # s_in: [B, P+2, L+2] (apply_fuse) or [B, P, L]; raw: [B, L, M] -> [B, P, M]
    B = s_in.shape[0]
    L, M = raw.shape[1], raw.shape[2]
    if apply_fuse:
        P = s_in.shape[1] - 2
    else:
        P = s_in.shape[1]
    kern = functools.partial(_fuse_softmax_attend_kernel,
                             scale=float(scale), apply_fuse=apply_fuse)
    return pl.pallas_call(
        kern,
        out_shape=jax.ShapeDtypeStruct((B, P, M), jnp.float32),
        grid=(B, M // tm),
        in_specs=[pl.BlockSpec((None,) + s_in.shape[1:], lambda bi, mi: (bi, 0, 0)),
                  pl.BlockSpec((None, L, tm), lambda bi, mi: (bi, 0, mi))],
        out_specs=pl.BlockSpec((None, P, tm), lambda bi, mi: (bi, 0, mi)),
        scratch_shapes=[pltpu.VMEM((P, L), jnp.float32)],
        compiler_params=pltpu.CompilerParams(
            dimension_semantics=("parallel", "arbitrary")),
    )(s_in, raw)


# ----------------------- pure-jnp references (self-check) --------------------

def _scores_ref(x_rows, w_cols):
    nrm = jnp.maximum(jnp.sqrt(jnp.sum(w_cols * w_cols, axis=1, keepdims=True)), 1e-4)
    return jnp.einsum('bpk,bkl->bpl', x_rows, w_cols / nrm)


def _fuse_ref(s):
    sp = jnp.pad(s, ((0, 0), (1, 1), (1, 1)))
    return sp[:, 1:-1, 1:-1] + sp[:, :-2, :-2] + sp[:, 2:, 2:]


def _softmax_attend_ref(s, raw, scale, apply_fuse):
    if apply_fuse:
        s = _fuse_ref(s)
    a = jax.nn.softmax(s * scale, axis=2)
    return jnp.einsum('bpl,blm->bpm', a, raw)


# ----------------------------- fold (conv_transpose overlap-add) -------------

def fold_patches_scatter(pc, C, K, Hf, Wf, stride, pad):
    """Reference conv_transpose2d fold: K*K strided scatter-adds (slow, used only
    on the pure-jnp reference path so it cross-validates the scatter-free fold)."""
    B = pc.shape[0]
    pc6 = pc.reshape(B, Hf, Wf, C, K, K)
    Ho = (Hf - 1) * stride + K
    Wo = (Wf - 1) * stride + K
    out = jnp.zeros((B, C, Ho, Wo), jnp.float32)
    for dy in range(K):
        for dx in range(K):
            sl = jnp.transpose(pc6[:, :, :, :, dy, dx], (0, 3, 1, 2))   # [B,C,Hf,Wf]
            out = out.at[:, :, dy:dy + stride * (Hf - 1) + 1:stride,
                               dx:dx + stride * (Wf - 1) + 1:stride].add(sl)
    return out[:, :, pad:Ho - pad, pad:Wo - pad]


def fold_patches(pc, C, K, Hf, Wf, stride, pad):
    """Scatter-free conv_transpose2d overlap-add for K == 2*stride (always true here
    since K = 2*rate and the fold stride is rate): split dy = qy*stride + ry so each
    output pixel is a dense sum of 4 shifted pad+add terms, then one transpose."""
    if K != 2 * stride:
        return fold_patches_scatter(pc, C, K, Hf, Wf, stride, pad)
    B, s = pc.shape[0], stride
    pc8 = pc.reshape(B, Hf, Wf, C, 2, s, 2, s)          # [..., qy, ry, qx, rx]
    acc = jnp.zeros((B, Hf + 1, Wf + 1, C, s, s), jnp.float32)
    for qy in range(2):
        for qx in range(2):
            term = pc8[:, :, :, :, qy, :, qx, :]        # [B, Hf, Wf, C, s, s]
            acc = acc + jnp.pad(
                term, ((0, 0), (qy, 1 - qy), (qx, 1 - qx), (0, 0), (0, 0), (0, 0)))
    out = jnp.transpose(acc, (0, 3, 1, 4, 2, 5))        # [B, C, h', ry, w', rx]
    out = out.reshape(B, C, (Hf + 1) * s, (Wf + 1) * s)
    Ho = (Hf - 1) * stride + K
    Wo = (Wf - 1) * stride + K
    return out[:, :, pad:Ho - pad, pad:Wo - pad]


# ----------------------------- forward ---------------------------------------

def non_local_block_2d_patch(f, b, *, ksize=3, stride=1, rate=2, fuse_k=3,
                             softmax_scale=10.0, fuse=True, use_pallas=True):
    B, C, _, _ = f.shape
    kernel = 2 * rate

    # raw KxK patches of full-res b, stride = rate*stride, 'same' padding: [B, L, C*K*K]
    raw_cols, _, _ = extract_patches_nchw(b, kernel, rate * stride)
    raw_patches = jnp.transpose(raw_cols, (0, 2, 1))

    # nearest downsample by rate (F.interpolate scale=1/rate, mode='nearest')
    fd = f[:, :, ::rate, ::rate]
    bd = b[:, :, ::rate, ::rate]
    Hf, Wf = fd.shape[2], fd.shape[3]
    Hb, Wb = bd.shape[2], bd.shape[3]
    P = Hf * Wf
    L = Hb * Wb
    M = raw_patches.shape[2]

    # background 3x3 patches as columns [B, C*k*k, L], foreground im2col rows [B, P, C*k*k]
    w_cols, _, _ = extract_patches_nchw(bd, ksize, stride)
    x_cols, _, _ = extract_patches_nchw(fd, ksize, 1)
    x_rows = jnp.transpose(x_cols, (0, 2, 1))

    # per-patch reciprocal norms: one tiny [B, 1, L] reduction here instead of
    # renormalizing the whole (CK, L) weight block inside K1 for every P tile
    ssq = jnp.sum(w_cols * w_cols, axis=1, keepdims=True)
    inv_nrm = 1.0 / jnp.maximum(jnp.sqrt(ssq), jnp.float32(1e-4))

    # pad the contraction dim (C*k*k) up to a multiple of 128 for lane-dense MXU tiles
    # (no-op at production channel counts, e.g. C=128 -> C*k*k = 1152 = 9*128)
    CK = w_cols.shape[1]
    CKp = ((CK + 127) // 128) * 128
    w_cols = jnp.pad(w_cols, ((0, 0), (0, CKp - CK), (0, 0)))
    x_rows = jnp.pad(x_rows, ((0, 0), (0, 0), (0, CKp - CK)))

    tp = _pick_tile(P, 512, 8)      # P tile for the scores matmul
    tm = _pick_tile(M, 512, 128)    # M tile for the attend matmul

    if use_pallas:
        s0 = scores_pallas(x_rows, w_cols, inv_nrm, tp)              # [B, P, L]
    else:
        s0 = _scores_ref(x_rows, w_cols)

    if fuse:
        # fuse pass 1 on the flat (p, l) indices
        if use_pallas:
            s1 = fuse_pallas(jnp.pad(s0, ((0, 0), (1, 1), (1, 1))))
        else:
            s1 = _fuse_ref(s0)
        # permute to primed flat indices p' = wf*Hf+hf, l' = wb*Hb+hb for fuse pass 2
        s1t = s1.reshape(B, Hf, Wf, Hb, Wb).transpose(0, 2, 1, 4, 3).reshape(B, P, L)
        raw_t = raw_patches.reshape(B, Hb, Wb, M).transpose(0, 2, 1, 3).reshape(B, L, M)
        if use_pallas:
            s1tp = jnp.pad(s1t, ((0, 0), (1, 1), (1, 1)))
            pc_t = fuse_softmax_attend_pallas(s1tp, raw_t, softmax_scale, True, tm)
        else:
            pc_t = _softmax_attend_ref(s1t, raw_t, softmax_scale, True)
        # un-permute the query-pixel axis back to p = hf*Wf + wf
        pc = pc_t.reshape(B, Wf, Hf, M).transpose(0, 2, 1, 3).reshape(B, P, M)
    else:
        if use_pallas:
            pc = fuse_softmax_attend_pallas(s0, raw_patches, softmax_scale, False, tm)
        else:
            pc = _softmax_attend_ref(s0, raw_patches, softmax_scale, False)

    # TODO(synk): torch also computes argmax "offsets" but never returns them; omitted.
    fold = fold_patches if use_pallas else fold_patches_scatter
    y = fold(pc, C, kernel, Hf, Wf, rate, pad=1) / 4.0               # conv_transpose2d
    return y


# ----------------------------- main ------------------------------------------

if __name__ == "__main__":
    key = jax.random.PRNGKey(0)
    kf, kb = jax.random.split(key)
    B, C, H, W = 2, 4, 16, 16
    f = jax.random.normal(kf, (B, C, H, W), dtype=jnp.float32)
    b = jax.random.normal(kb, (B, C, H, W), dtype=jnp.float32)

    fwd = jax.jit(lambda f_, b_: non_local_block_2d_patch(f_, b_, use_pallas=True))
    ref = jax.jit(lambda f_, b_: non_local_block_2d_patch(f_, b_, use_pallas=False))

    y = jax.block_until_ready(fwd(f, b))
    assert y.shape == (B, C, H, W), y.shape

    # self-check: Pallas kernels + scatter-free fold vs pure-jnp / scatter reference
    y_ref = jax.block_until_ready(ref(f, b))
    np.testing.assert_allclose(np.asarray(y), np.asarray(y_ref), rtol=2e-3, atol=2e-3)

    print("KERNEL_OK")
</pallas_src>

<mosaic_0001>
module attributes {stable_mosaic.version = 11 : i64} {
  func.func @_scores_kernel(%arg0: i32, %arg1: i32, %arg2: memref<1x64x128xf32, #tpu.memory_space<vmem>>, %arg3: memref<1x128x64xf32, #tpu.memory_space<vmem>>, %arg4: memref<1x1x64xf32, #tpu.memory_space<vmem>>, %arg5: memref<1x64x64xf32, #tpu.memory_space<vmem>>) attributes {dimension_semantics = [#tpu.dimension_semantics<parallel>, #tpu.dimension_semantics<parallel>], iteration_bounds = array<i64: 2, 1>, scalar_prefetch = 0 : i64, scratch_operands = 0 : i64, tpu.core_type = #tpu.core_type<tc>, window_params = [{transform_indices = @transform_0, window_bounds = array<i64: 1, 64, 128>}, {transform_indices = @transform_1, window_bounds = array<i64: 1, 128, 64>}, {transform_indices = @transform_2, window_bounds = array<i64: 1, 1, 64>}, {transform_indices = @transform_3, window_bounds = array<i64: 1, 64, 64>}]} {
    %c0 = arith.constant 0 : index
    %c0_0 = arith.constant 0 : index
    %c0_1 = arith.constant 0 : index
    %0 = vector.load %arg2[%c0, %c0_0, %c0_1] : memref<1x64x128xf32, #tpu.memory_space<vmem>>, vector<1x64x128xf32>
    %1 = vector.shape_cast %0 : vector<1x64x128xf32> to vector<64x128xf32>
    %c0_2 = arith.constant 0 : index
    %c0_3 = arith.constant 0 : index
    %c0_4 = arith.constant 0 : index
    %2 = vector.load %arg3[%c0_2, %c0_3, %c0_4] : memref<1x128x64xf32, #tpu.memory_space<vmem>>, vector<1x128x64xf32>
    %3 = vector.shape_cast %2 : vector<1x128x64xf32> to vector<128x64xf32>
    %cst = arith.constant dense<0.000000e+00> : vector<64x64xf32>
    %4 = tpu.matmul %1, %3, %cst {dimension_numbers = #tpu.dot_dimension_numbers<[1], [0], [0], [1], [0, 0, 1, 1], [], []>} : vector<64x128xf32>, vector<128x64xf32>, vector<64x64xf32> -> vector<64x64xf32>
    %c0_5 = arith.constant 0 : index
    %c0_6 = arith.constant 0 : index
    %c0_7 = arith.constant 0 : index
    %5 = vector.load %arg4[%c0_5, %c0_6, %c0_7] : memref<1x1x64xf32, #tpu.memory_space<vmem>>, vector<1x1x64xf32>
    %6 = vector.shape_cast %5 : vector<1x1x64xf32> to vector<1x64xf32>
    %7 = vector.broadcast %6 : vector<1x64xf32> to vector<64x64xf32>
    %8 = arith.mulf %4, %7 : vector<64x64xf32>
    %c0_8 = arith.constant 0 : index
    %c0_9 = arith.constant 0 : index
    %c0_10 = arith.constant 0 : index
    %9 = vector.load %arg5[%c0_8, %c0_9, %c0_10] : memref<1x64x64xf32, #tpu.memory_space<vmem>>, vector<1x64x64xf32>
    %10 = vector.shape_cast %9 : vector<1x64x64xf32> to vector<64x64xf32>
    %11 = vector.shape_cast %8 : vector<64x64xf32> to vector<1x64x64xf32>
    tpu.vector_store %arg5[%c0_8, %c0_9, %c0_10], %11 {strides = array<i32>} : memref<1x64x64xf32, #tpu.memory_space<vmem>>, vector<1x64x64xf32>,
    return
  }
  func.func @transform_0(%arg0: i32, %arg1: i32) -> (i32, i32, i32) {
    %c0_i32 = arith.constant 0 : i32
    %c0_i32_0 = arith.constant 0 : i32
    return %arg0, %arg1, %c0_i32 : i32, i32, i32
  }
  func.func @transform_1(%arg0: i32, %arg1: i32) -> (i32, i32, i32) {
    %c0_i32 = arith.constant 0 : i32
    %c0_i32_0 = arith.constant 0 : i32
    %c0_i32_1 = arith.constant 0 : i32
    return %arg0, %c0_i32, %c0_i32_0 : i32, i32, i32
  }
  func.func @transform_2(%arg0: i32, %arg1: i32) -> (i32, i32, i32) {
    %c0_i32 = arith.constant 0 : i32
    %c0_i32_0 = arith.constant 0 : i32
    %c0_i32_1 = arith.constant 0 : i32
    return %arg0, %c0_i32, %c0_i32_0 : i32, i32, i32
  }
  func.func @transform_3(%arg0: i32, %arg1: i32) -> (i32, i32, i32) {
    %c0_i32 = arith.constant 0 : i32
    %c0_i32_0 = arith.constant 0 : i32
    return %arg0, %arg1, %c0_i32 : i32, i32, i32
  }
}

module attributes {stable_mosaic.version = 11 : i64} {
  func.func @_fuse_kernel(%arg0: i32, %arg1: memref<1x66x66xf32, #tpu.memory_space<vmem>>, %arg2: memref<1x64x64xf32, #tpu.memory_space<vmem>>) attributes {dimension_semantics = [#tpu.dimension_semantics<parallel>], iteration_bounds = array<i64: 2>, scalar_prefetch = 0 : i64, scratch_operands = 0 : i64, tpu.core_type = #tpu.core_type<tc>, window_params = [{transform_indices = @transform_0, window_bounds = array<i64: 1, 66, 66>}, {transform_indices = @transform_1, window_bounds = array<i64: 1, 64, 64>}]} {
    %c0 = arith.constant 0 : index
    %c1 = arith.constant 1 : index
    %c1_0 = arith.constant 1 : index
    %0 = vector.load %arg1[%c0, %c1, %c1_0] : memref<1x66x66xf32, #tpu.memory_space<vmem>>, vector<1x64x64xf32>
    %1 = vector.shape_cast %0 : vector<1x64x64xf32> to vector<64x64xf32>
    %c0_1 = arith.constant 0 : index
    %c0_2 = arith.constant 0 : index
    %c0_3 = arith.constant 0 : index
    %2 = vector.load %arg1[%c0_1, %c0_2, %c0_3] : memref<1x66x66xf32, #tpu.memory_space<vmem>>, vector<1x64x64xf32>
    %3 = vector.shape_cast %2 : vector<1x64x64xf32> to vector<64x64xf32>
    %4 = arith.addf %1, %3 : vector<64x64xf32>
    %c0_4 = arith.constant 0 : index
    %c2 = arith.constant 2 : index
    %c2_5 = arith.constant 2 : index
    %5 = vector.load %arg1[%c0_4, %c2, %c2_5] : memref<1x66x66xf32, #tpu.memory_space<vmem>>, vector<1x64x64xf32>
    %6 = vector.shape_cast %5 : vector<1x64x64xf32> to vector<64x64xf32>
    %7 = arith.addf %4, %6 : vector<64x64xf32>
    %c0_6 = arith.constant 0 : index
    %c0_7 = arith.constant 0 : index
    %c0_8 = arith.constant 0 : index
    %8 = vector.load %arg2[%c0_6, %c0_7, %c0_8] : memref<1x64x64xf32, #tpu.memory_space<vmem>>, vector<1x64x64xf32>
    %9 = vector.shape_cast %8 : vector<1x64x64xf32> to vector<64x64xf32>
    %10 = vector.shape_cast %7 : vector<64x64xf32> to vector<1x64x64xf32>
    tpu.vector_store %arg2[%c0_6, %c0_7, %c0_8], %10 {strides = array<i32>} : memref<1x64x64xf32, #tpu.memory_space<vmem>>, vector<1x64x64xf32>,
    return
  }
  func.func @transform_0(%arg0: i32) -> (i32, i32, i32) {
    %c0_i32 = arith.constant 0 : i32
    %c0_i32_0 = arith.constant 0 : i32
    %c0_i32_1 = arith.constant 0 : i32
    return %arg0, %c0_i32, %c0_i32_0 : i32, i32, i32
  }
  func.func @transform_1(%arg0: i32) -> (i32, i32, i32) {
    %c0_i32 = arith.constant 0 : i32
    %c0_i32_0 = arith.constant 0 : i32
    %c0_i32_1 = arith.constant 0 : i32
    return %arg0, %c0_i32, %c0_i32_0 : i32, i32, i32
  }
}

module attributes {stable_mosaic.version = 11 : i64} {
  func.func @_fuse_softmax_attend_kernel(%arg0: i32, %arg1: i32, %arg2: memref<1x66x66xf32, #tpu.memory_space<vmem>>, %arg3: memref<1x64x64xf32, #tpu.memory_space<vmem>>, %arg4: memref<1x64x64xf32, #tpu.memory_space<vmem>>, %arg5: memref<64x64xf32, #tpu.memory_space<vmem>>) attributes {dimension_semantics = [#tpu.dimension_semantics<parallel>, #tpu.dimension_semantics<arbitrary>], iteration_bounds = array<i64: 2, 1>, scalar_prefetch = 0 : i64, scratch_operands = 1 : i64, tpu.core_type = #tpu.core_type<tc>, window_params = [{transform_indices = @transform_0, window_bounds = array<i64: 1, 66, 66>}, {transform_indices = @transform_1, window_bounds = array<i64: 1, 64, 64>}, {transform_indices = @transform_2, window_bounds = array<i64: 1, 64, 64>}]} {
    %c0_i32 = arith.constant 0 : i32
    %0 = arith.cmpi eq, %arg1, %c0_i32 : i32
    %1 = arith.extui %0 : i1 to i32
    %c0_i32_0 = arith.constant 0 : i32
    %2 = arith.cmpi ne, %1, %c0_i32_0 : i32
    scf.if %2 {
      %c0_8 = arith.constant 0 : index
      %c1 = arith.constant 1 : index
      %c1_9 = arith.constant 1 : index
      %10 = vector.load %arg2[%c0_8, %c1, %c1_9] : memref<1x66x66xf32, #tpu.memory_space<vmem>>, vector<1x64x64xf32>
      %11 = vector.shape_cast %10 : vector<1x64x64xf32> to vector<64x64xf32>
      %c0_10 = arith.constant 0 : index
      %c0_11 = arith.constant 0 : index
      %c0_12 = arith.constant 0 : index
      %12 = vector.load %arg2[%c0_10, %c0_11, %c0_12] : memref<1x66x66xf32, #tpu.memory_space<vmem>>, vector<1x64x64xf32>
      %13 = vector.shape_cast %12 : vector<1x64x64xf32> to vector<64x64xf32>
      %14 = arith.addf %11, %13 : vector<64x64xf32>
      %c0_13 = arith.constant 0 : index
      %c2 = arith.constant 2 : index
      %c2_14 = arith.constant 2 : index
      %15 = vector.load %arg2[%c0_13, %c2, %c2_14] : memref<1x66x66xf32, #tpu.memory_space<vmem>>, vector<1x64x64xf32>
      %16 = vector.shape_cast %15 : vector<1x64x64xf32> to vector<64x64xf32>
      %17 = arith.addf %14, %16 : vector<64x64xf32>
      %cst_15 = arith.constant 1.000000e+01 : f32
      %18 = vector.broadcast %cst_15 : f32 to vector<64x64xf32>
      %19 = arith.mulf %17, %18 : vector<64x64xf32>
      %cst_16 = arith.constant dense<0xFF800000> : vector<64xf32>
      %20 = vector.multi_reduction <maximumf>, %19, %cst_16 [1] : vector<64x64xf32> to vector<64xf32>
      %21 = vector.shape_cast %20 : vector<64xf32> to vector<64x1xf32>
      %22 = vector.broadcast %21 : vector<64x1xf32> to vector<64x64xf32>
      %23 = arith.subf %19, %22 : vector<64x64xf32>
      %24 = math.exp %23 : vector<64x64xf32>
      %cst_17 = arith.constant dense<0.000000e+00> : vector<64xf32>
      %25 = vector.multi_reduction <add>, %24, %cst_17 [1] : vector<64x64xf32> to vector<64xf32>
      %26 = vector.shape_cast %25 : vector<64xf32> to vector<64x1xf32>
      %27 = tpu.reciprocal %26 : vector<64x1xf32> -> vector<64x1xf32>
      %28 = vector.broadcast %27 : vector<64x1xf32> to vector<64x64xf32>
      %29 = arith.mulf %24, %28 : vector<64x64xf32>
      %c0_18 = arith.constant 0 : index
      %c0_19 = arith.constant 0 : index
      %30 = vector.load %arg5[%c0_18, %c0_19] : memref<64x64xf32, #tpu.memory_space<vmem>>, vector<64x64xf32>
      tpu.vector_store %arg5[%c0_18, %c0_19], %29 {strides = array<i32>} : memref<64x64xf32, #tpu.memory_space<vmem>>, vector<64x64xf32>,
    } else {
    }
    %c0 = arith.constant 0 : index
    %c0_1 = arith.constant 0 : index
    %3 = vector.load %arg5[%c0, %c0_1] : memref<64x64xf32, #tpu.memory_space<vmem>>, vector<64x64xf32>
    %c0_2 = arith.constant 0 : index
    %c0_3 = arith.constant 0 : index
    %c0_4 = arith.constant 0 : index
    %4 = vector.load %arg3[%c0_2, %c0_3, %c0_4] : memref<1x64x64xf32, #tpu.memory_space<vmem>>, vector<1x64x64xf32>
    %5 = vector.shape_cast %4 : vector<1x64x64xf32> to vector<64x64xf32>
    %cst = arith.constant dense<0.000000e+00> : vector<64x64xf32>
    %6 = tpu.matmul %3, %5, %cst {dimension_numbers = #tpu.dot_dimension_numbers<[1], [0], [0], [1], [0, 0, 1, 1], [], []>} : vector<64x64xf32>, vector<64x64xf32>, vector<64x64xf32> -> vector<64x64xf32>
    %c0_5 = arith.constant 0 : index
    %c0_6 = arith.constant 0 : index
    %c0_7 = arith.constant 0 : index
    %7 = vector.load %arg4[%c0_5, %c0_6, %c0_7] : memref<1x64x64xf32, #tpu.memory_space<vmem>>, vector<1x64x64xf32>
    %8 = vector.shape_cast %7 : vector<1x64x64xf32> to vector<64x64xf32>
    %9 = vector.shape_cast %6 : vector<64x64xf32> to vector<1x64x64xf32>
    tpu.vector_store %arg4[%c0_5, %c0_6, %c0_7], %9 {strides = array<i32>} : memref<1x64x64xf32, #tpu.memory_space<vmem>>, vector<1x64x64xf32>,
    return
  }
  func.func @transform_0(%arg0: i32, %arg1: i32) -> (i32, i32, i32) {
    %c0_i32 = arith.constant 0 : i32
    %c0_i32_0 = arith.constant 0 : i32
    %c0_i32_1 = arith.constant 0 : i32
    return %arg0, %c0_i32, %c0_i32_0 : i32, i32, i32
  }
  func.func @transform_1(%arg0: i32, %arg1: i32) -> (i32, i32, i32) {
    %c0_i32 = arith.constant 0 : i32
    %c0_i32_0 = arith.constant 0 : i32
    return %arg0, %c0_i32, %arg1 : i32, i32, i32
  }
  func.func @transform_2(%arg0: i32, %arg1: i32) -> (i32, i32, i32) {
    %c0_i32 = arith.constant 0 : i32
    %c0_i32_0 = arith.constant 0 : i32
    return %arg0, %c0_i32, %arg1 : i32, i32, i32
  }
}

</mosaic_0001>

<llo_original>
// kernel: _lambda_.3
$region0: #{_lambda_.3}
  #allocation0 [shape = 'u32[]', space=smem, size = 0x4, offset = 0x4, fixed_abs, tag = 'smem constant byte address 0x4 - core index']
  #allocation1 [shape = 'u32[144,128]{1,0:T(1,128)}', space=vmem, size = 0x12000, scoped, tag = 'internal scratch']
  %s0 = inlined_call_operand.vmem [shape: f32[2,64,128], index: 0, kind: input, shape index: {}]
  %s1 = inlined_call_operand.vmem [shape: f32[2,128,64], index: 1, kind: input, shape index: {}]
  %s2 = inlined_call_operand.vmem [shape: f32[2,1,64], index: 2, kind: input, shape index: {}]
  %s3 = inlined_call_operand.vmem [shape: f32[2,64,64], index: 3, kind: output, shape index: {}]
  %s4 = sld [smem:[#allocation0]]
  $region45: #{_lambda_.3} parent=0
    _
  %s6 = ssub.s32 1, %s4
  %s7 = scalar_select 0, %s6, %s4
  loop: start=0, step=1, limit=4
  $region2: #{_lambda_.3} parent=0 // loop_pre_header
    _
  $region3: #{_lambda_.3} parent=0 // loop_header
    %s9 = sphi 0, %s13
    %p10 = scmp.ge.s32.totalorder %s9, 4
    %s16 = sphi 0, %s28
    %s17 = sphi 0, %s24
    %s18 = sphi 0, %s16
    %s19 = sphi 0, %s17
    %s20 = sphi 0, %s18
    %s21 = sphi 0, %s19
    %s33 = sphi 0, %s35
    %s36 = sphi 0, %s33
    %s37 = sphi 0, %s36
    %s53 = sphi 0, %s37
    %s59 = sphi 0, %s61
    %s62 = sphi 0, %s59
    %s63 = sphi 0, %s62
    %s79 = sphi 0, %s63
    %s85 = sphi 0, %s87
    %s88 = sphi 0, %s85
    %s89 = sphi 0, %s88
    %s105 = sphi 0, %s89
    %s113 = sphi 0, %s115
    %s116 = sphi 0, %s113
    %s117 = sphi 0, %s116
    %s133 = sphi 0, %s117
  $region4: #{_lambda_.3} parent=0 // loop_header_branch
    %12 = sbr.rel (%p10) target = $region8
  $region5: #{_lambda_.3} parent=0 // loop_body
    %s14 = ssub.s32 %s9, 1
    %s15 = ssub.s32 %s9, 2
    %s22 = sadd.s32 1, %s17
    %p23 = scmp.ge.s32.totalorder %s22, 1
    %s24 = scalar_select %p23, 0, %s22
    %s25 = sadd.s32 1, %s16
    %s26 = scalar_select %p23, %s25, %s16
    %p27 = scmp.ge.s32.totalorder %s26, 2
    %s28 = scalar_select %p27, 0, %s26
    %s29 = ssub.s32 %s16, %s28
    %s30 = ssub.s32 %s17, %s24
    %s31 = sor.u32 %s29, %s30
    %p32 = scmp.eq.s32.totalorder %s31, 0
    %s34 = sadd.s32 %s33, 1
    %s35 = scalar_select %p32, %s33, %s34
    %p38 = pneg %p32
    %p39 = scmp.eq.s32.totalorder %s9, 1
    %p40 = por %p38, %p39
    %p41 = scmp.ne.s32.totalorder %s33, %s36
    %p42 = scmp.eq.s32.totalorder %s9, 0
    %p43 = por %p41, %p42
    %p44 = scmp.ne.s32.totalorder %s33, %s36
    %p45 = scmp.eq.s32.totalorder %s14, 1
    %p46 = por %p44, %p45
    %p47 = scmp.ne.s32.totalorder %s36, %s37
    %p48 = scmp.eq.s32.totalorder %s14, 0
    %p49 = por %p47, %p48
    %p50 = scmp.ne.s32.totalorder %s36, %s37
    %p51 = scmp.eq.s32.totalorder %s15, 1
    %p52 = por %p50, %p51
    %p54 = scmp.ne.s32.totalorder %s37, %s53
    %p55 = scmp.eq.s32.totalorder %s15, 0
    %p56 = por %p54, %p55
    %s57 = ssub.s32 %s16, %s28
    %p58 = scmp.eq.s32.totalorder %s57, 0
    %s60 = sadd.s32 %s59, 1
    %s61 = scalar_select %p58, %s59, %s60
    %p64 = pneg %p58
    %p65 = scmp.eq.s32.totalorder %s9, 1
    %p66 = por %p64, %p65
    %p67 = scmp.ne.s32.totalorder %s59, %s62
    %p68 = scmp.eq.s32.totalorder %s9, 0
    %p69 = por %p67, %p68
    %p70 = scmp.ne.s32.totalorder %s59, %s62
    %p71 = scmp.eq.s32.totalorder %s14, 1
    %p72 = por %p70, %p71
    %p73 = scmp.ne.s32.totalorder %s62, %s63
    %p74 = scmp.eq.s32.totalorder %s14, 0
    %p75 = por %p73, %p74
    %p76 = scmp.ne.s32.totalorder %s62, %s63
    %p77 = scmp.eq.s32.totalorder %s15, 1
    %p78 = por %p76, %p77
    %p80 = scmp.ne.s32.totalorder %s63, %s79
    %p81 = scmp.eq.s32.totalorder %s15, 0
    %p82 = por %p80, %p81
    %s83 = ssub.s32 %s16, %s28
    %p84 = scmp.eq.s32.totalorder %s83, 0
    %s86 = sadd.s32 %s85, 1
    %s87 = scalar_select %p84, %s85, %s86
    %p90 = pneg %p84
    %p91 = scmp.eq.s32.totalorder %s9, 1
    %p92 = por %p90, %p91
    %p93 = scmp.ne.s32.totalorder %s85, %s88
    %p94 = scmp.eq.s32.totalorder %s9, 0
    %p95 = por %p93, %p94
    %p96 = scmp.ne.s32.totalorder %s85, %s88
    %p97 = scmp.eq.s32.totalorder %s14, 1
    %p98 = por %p96, %p97
    %p99 = scmp.ne.s32.totalorder %s88, %s89
    %p100 = scmp.eq.s32.totalorder %s14, 0
    %p101 = por %p99, %p100
    %p102 = scmp.ne.s32.totalorder %s88, %s89
    %p103 = scmp.eq.s32.totalorder %s15, 1
    %p104 = por %p102, %p103
    %p106 = scmp.ne.s32.totalorder %s89, %s105
    %p107 = scmp.eq.s32.totalorder %s15, 0
    %p108 = por %p106, %p107
    %s109 = ssub.s32 %s16, %s28
    %s110 = ssub.s32 %s17, %s24
    %s111 = sor.u32 %s109, %s110
    %p112 = scmp.eq.s32.totalorder %s111, 0
    %s114 = sadd.s32 %s113, 1
    %s115 = scalar_select %p112, %s113, %s114
    %p118 = pneg %p112
    %p119 = scmp.eq.s32.totalorder %s9, 1
    %p120 = por %p118, %p119
    %p121 = scmp.ne.s32.totalorder %s113, %s116
    %p122 = scmp.eq.s32.totalorder %s9, 0
    %p123 = por %p121, %p122
    %p124 = scmp.ne.s32.totalorder %s113, %s116
    %p125 = scmp.eq.s32.totalorder %s14, 1
    %p126 = por %p124, %p125
    %p127 = scmp.ne.s32.totalorder %s116, %s117
    %p128 = scmp.eq.s32.totalorder %s14, 0
    %p129 = por %p127, %p128
    %p130 = scmp.ne.s32.totalorder %s116, %s117
    %p131 = scmp.eq.s32.totalorder %s15, 1
    %p132 = por %p130, %p131
    %p134 = scmp.ne.s32.totalorder %s117, %s133
    %p135 = scmp.eq.s32.totalorder %s15, 0
    %p136 = por %p134, %p135
    %p137 = scmp.le.s32.totalorder 1, %s9
    %p138 = scmp.lt.s32.totalorder %s9, 3
    %p139 = pnand %p137, %p138
    %p140 = pneg %p139
    // Predicated region
    $region9: #{_lambda_.3} parent=5 // pred_check
      _
    $region10: #{_lambda_.3} parent=5 // pred_check_branch
      %142 = sbr.rel (%p139) target = $region12
    $region11: #{_lambda_.3} parent=5 // pred_region
      %s143 = ssub.s32 %s9, 1
    $region12: #{_lambda_.3} parent=5 // pred_fallthru
      _
    %p144 = scmp.lt.s32.totalorder %s9, 2
    // Predicated region
    $region13: #{_lambda_.3} parent=5 // pred_check
      %p145 = pneg %p144
    $region14: #{_lambda_.3} parent=5 // pred_check_branch
      %147 = sbr.rel (%p145) target = $region16
    $region15: #{_lambda_.3} parent=5 // pred_region
      // Predicated region
      $region17: #{_lambda_.3} parent=15 // pred_check
        %p148 = pneg %p43
      $region18: #{_lambda_.3} parent=15 // pred_check_branch
        %150 = sbr.rel (%p148) target = $region20
      $region19: #{_lambda_.3} parent=15 // pred_region
        %s151 = smul.u32 8, %s17
        %p152 = scmp.lt.s32.totalorder %s16, 1
        %s153 = scalar_select %p152, %s16, 1
        %p154 = scmp.lt.s32.totalorder %s151, 7
        %s155 = scalar_select %p154, %s151, 7
        %s156 = smul.addr %s153, 8
        %s157 = sadd.s32 %s155, %s156
        %s158 = smul.addr %s157, 8
        %s159 = scalar_lea.vmem %s0, %s158
        %s160 = smul.u32 8, %s17
      $region20: #{_lambda_.3} parent=15 // pred_fallthru
        _
      // Predicated region
      $region21: #{_lambda_.3} parent=15 // pred_check
        %p161 = pneg %p69
      $region22: #{_lambda_.3} parent=15 // pred_check_branch
        %163 = sbr.rel (%p161) target = $region24
      $region23: #{_lambda_.3} parent=15 // pred_region
        %p164 = scmp.lt.s32.totalorder %s16, 1
        %s165 = scalar_select %p164, %s16, 1
        %s166 = smul.addr %s165, 16
        %s167 = smul.addr %s166, 8
        %s168 = scalar_lea.vmem %s1, %s167
      $region24: #{_lambda_.3} parent=15 // pred_fallthru
        _
      // Predicated region
      $region25: #{_lambda_.3} parent=15 // pred_check
        %p169 = pneg %p95
      $region26: #{_lambda_.3} parent=15 // pred_check_branch
        %171 = sbr.rel (%p169) target = $region28
      $region27: #{_lambda_.3} parent=15 // pred_region
        %p172 = scmp.lt.s32.totalorder %s16, 1
        %s173 = scalar_select %p172, %s16, 1
        %s174 = scalar_lea.vmem %s2, %s173
      $region28: #{_lambda_.3} parent=15 // pred_fallthru
        _
    $region16: #{_lambda_.3} parent=5 // pred_fallthru
      _
    %p175 = scmp.le.s32.totalorder 1, %s9
    %p176 = scmp.lt.s32.totalorder %s9, 3
    %p177 = pnand %p175, %p176
    %p178 = pneg %p177
    // Predicated region
    $region29: #{_lambda_.3} parent=5 // pred_check
      _
    $region30: #{_lambda_.3} parent=5 // pred_check_branch
      %180 = sbr.rel (%p177) target = $region32
    $region31: #{_lambda_.3} parent=5 // pred_region
      %s181 = ssub.s32 %s9, 1
      %s182 = smul.u32 8, %s19
      %p183 = scmp.lt.s32.totalorder %s18, 1
      %s184 = scalar_select %p183, %s18, 1
      %p185 = scmp.lt.s32.totalorder %s182, 7
      %s186 = scalar_select %p185, %s182, 7
      %s187 = smul.addr %s184, 8
      %s188 = sadd.s32 %s186, %s187
      %s189 = smul.addr %s188, 8
      %s190 = scalar_lea.vmem %s0, %s189
      %p191 = pneg %p49
      %p192 = pneg %p46
      %p193 = scmp.lt.s32.totalorder %s18, 1
      %s194 = scalar_select %p193, %s18, 1
      %s195 = smul.addr %s194, 16
      %s196 = smul.addr %s195, 8
      %s197 = scalar_lea.vmem %s1, %s196
      %p198 = pneg %p75
      %p199 = pneg %p72
      %p200 = scmp.lt.s32.totalorder %s18, 1
      %s201 = scalar_select %p200, %s18, 1
      %s202 = scalar_lea.vmem %s2, %s201
      %p203 = pneg %p101
      %p204 = pneg %p98
      %p205 = pneg %p129
      %p206 = pneg %p126
      %s207 = smul.u32 8, %s19
      %p208 = scmp.lt.s32.totalorder %s18, 1
      %s209 = scalar_select %p208, %s18, 1
      %p210 = scmp.lt.s32.totalorder %s207, 7
      %s211 = scalar_select %p210, %s207, 7
      %s212 = smul.addr %s209, 8
      %s213 = sadd.s32 %s211, %s212
      %s214 = smul.addr %s213, 8
      %s215 = scalar_lea.vmem %s3, %s214
      %s216 = smul.u32 8, %s19
      %p217 = scmp.lt.s32.totalorder %s18, 1
      %s218 = scalar_select %p217, %s18, 1
      %p219 = scmp.lt.s32.totalorder %s216, 7
      %s220 = scalar_select %p219, %s216, 7
      %s221 = smul.addr %s218, 8
      %s222 = sadd.s32 %s220, %s221
      %s223 = smul.addr %s222, 8
      %s224 = scalar_lea.vmem %s0, %s223
      %s225 = smul.u32 8, %s19
      %p226 = scmp.lt.s32.totalorder %s18, 1
      %s227 = scalar_select %p226, %s18, 1
      %s228 = smul.addr %s227, 16
      %s229 = smul.addr %s228, 8
      %s230 = scalar_lea.vmem %s1, %s229
      %p231 = scmp.lt.s32.totalorder %s18, 1
      %s232 = scalar_select %p231, %s18, 1
      %s233 = scalar_lea.vmem %s2, %s232
      %s234 = smul.u32 8, %s19
      %p235 = scmp.lt.s32.totalorder %s18, 1
      %s236 = scalar_select %p235, %s18, 1
      %p237 = scmp.lt.s32.totalorder %s234, 7
      %s238 = scalar_select %p237, %s234, 7
      %s239 = smul.addr %s236, 8
      %s240 = sadd.s32 %s238, %s239
      %s241 = smul.addr %s240, 8
      %s242 = scalar_lea.vmem %s3, %s241
      %s243 = smul.u32 8, %s19
      %v244 = vld [vmem:[%s224] sm:$0xff]
      %v245 = vld [vmem:[%s224 + $0x8] sm:$0xff]
      %v246 = vld [vmem:[%s224 + $0x10] sm:$0xff]
      %v247 = vld [vmem:[%s224 + $0x18] sm:$0xff]
      %v248 = vld [vmem:[%s224 + $0x20] sm:$0xff]
      %v249 = vld [vmem:[%s224 + $0x28] sm:$0xff]
      %v250 = vld [vmem:[%s224 + $0x30] sm:$0xff]
      %v251 = vld [vmem:[%s224 + $0x38] sm:$0xff]
      %v252 = vld [vmem:[%s230] sm:$0xff]
      %v253 = vld [vmem:[%s230 + $0x8] sm:$0xff]
      %v254 = vld [vmem:[%s230 + $0x10] sm:$0xff]
      %v255 = vld [vmem:[%s230 + $0x18] sm:$0xff]
      %v256 = vld [vmem:[%s230 + $0x20] sm:$0xff]
      %v257 = vld [vmem:[%s230 + $0x28] sm:$0xff]
      %v258 = vld [vmem:[%s230 + $0x30] sm:$0xff]
      %v259 = vld [vmem:[%s230 + $0x38] sm:$0xff]
      %v260 = vld [vmem:[%s230 + $0x40] sm:$0xff]
      %v261 = vld [vmem:[%s230 + $0x48] sm:$0xff]
      %v262 = vld [vmem:[%s230 + $0x50] sm:$0xff]
      %v263 = vld [vmem:[%s230 + $0x58] sm:$0xff]
      %v264 = vld [vmem:[%s230 + $0x60] sm:$0xff]
      %v265 = vld [vmem:[%s230 + $0x68] sm:$0xff]
      %v266 = vld [vmem:[%s230 + $0x70] sm:$0xff]
      %v267 = vld [vmem:[%s230 + $0x78] sm:$0xff]
      %268 = vmatprep.subr.mxu0 0.0
      %269 = vmatpush1.msra.mxu0 %v267
      %270 = vmatprep.subr.mxu0 0.0
      %271 = vmatpush1.msra.mxu0 %v266
      %272 = vmatprep.subr.mxu0 0.0
      %273 = vmatpush1.msra.mxu0 %v265
      %274 = vmatprep.subr.mxu0 0.0
      %275 = vmatpush1.msra.mxu0 %v264
      %276 = vmatprep.subr.mxu0 0.0
      %277 = vmatpush1.msra.mxu0 %v263
      %278 = vmatprep.subr.mxu0 0.0
      %279 = vmatpush1.msra.mxu0 %v262
      %280 = vmatprep.subr.mxu0 0.0
      %281 = vmatpush1.msra.mxu0 %v261
      %282 = vmatprep.subr.mxu0 0.0
      %283 = vmatpush1.msra.mxu0 %v260
      %284 = vmatprep.subr.mxu0 0.0
      %285 = vmatpush1.msra.mxu0 %v259
      %286 = vmatprep.subr.mxu0 0.0
      %287 = vmatpush1.msra.mxu0 %v258
      %288 = vmatprep.subr.mxu0 0.0
      %289 = vmatpush1.msra.mxu0 %v257
      %290 = vmatprep.subr.mxu0 0.0
      %291 = vmatpush1.msra.mxu0 %v256
      %292 = vmatprep.subr.mxu0 0.0
      %293 = vmatpush1.msra.mxu0 %v255
      %294 = vmatprep.subr.mxu0 0.0
      %295 = vmatpush1.msra.mxu0 %v254
      %296 = vmatprep.subr.mxu0 0.0
      %297 = vmatpush1.msra.mxu0 %v253
      %298 = vmatprep.subr.mxu0 0.0
      %299 = vmatpush1.msra.mxu0 %v252
      %300 = vmatprep.subr.mxu0 0.0
      %301 = vmatpush2.msra.mxu0 0.0
      %302 = vmatprep.subr.mxu0 0.0
      %303 = vmatpush2.msra.mxu0 0.0
      %304 = vmatprep.subr.mxu0 0.0
      %305 = vmatpush2.msra.mxu0 0.0
      %306 = vmatprep.subr.mxu0 0.0
      %307 = vmatpush2.msra.mxu0 0.0
      %308 = vmatprep.subr.mxu0 0.0
      %309 = vmatpush2.msra.mxu0 0.0
      %310 = vmatprep.subr.mxu0 0.0
      %311 = vmatpush2.msra.mxu0 0.0
      %312 = vmatprep.subr.mxu0 0.0
      %313 = vmatpush2.msra.mxu0 0.0
      %314 = vmatprep.subr.mxu0 0.0
      %315 = vmatpush2.msra.mxu0 0.0
      %316 = vmatprep.subr.mxu0 0.0
      %317 = vmatpush2.msra.mxu0 0.0
      %318 = vmatprep.subr.mxu0 0.0
      %319 = vmatpush2.msra.mxu0 0.0
      %320 = vmatprep.subr.mxu0 0.0
      %321 = vmatpush2.msra.mxu0 0.0
      %322 = vmatprep.subr.mxu0 0.0
      %323 = vmatpush2.msra.mxu0 0.0
      %324 = vmatprep.subr.mxu0 0.0
      %325 = vmatpush2.msra.mxu0 0.0
      %326 = vmatprep.subr.mxu0 0.0
      %327 = vmatpush2.msra.mxu0 0.0
      %328 = vmatprep.subr.mxu0 0.0
      %329 = vmatpush2.msra.mxu0 0.0
      %330 = vmatprep.subr.mxu0 0.0
      %331 = vmatpush2.msra.mxu0 0.0
      %332 = vmatprep.mubr.f32.mxu0 0.0
      %333 = vmatmul.mubr.f32.gmra.mxu0 %v244
      %v334 = vpop.f32.mrf.mxu0
      %v335 = vadd.f32 0.0, %v334
      %v336 = vpop.f32.mrf.mxu0
      %337 = vmatprep.mubr.f32.mxu0 0.0
      %338 = vmatmul.mubr.f32.gmra.mxu0 %v245
      %v339 = vpop.f32.mrf.mxu0
      %v340 = vadd.f32 0.0, %v339
      %v341 = vpop.f32.mrf.mxu0
      %342 = vmatprep.mubr.f32.mxu0 0.0
      %343 = vmatmul.mubr.f32.gmra.mxu0 %v246
      %v344 = vpop.f32.mrf.mxu0
      %v345 = vadd.f32 0.0, %v344
      %v346 = vpop.f32.mrf.mxu0
      %347 = vmatprep.mubr.f32.mxu0 0.0
      %348 = vmatmul.mubr.f32.gmra.mxu0 %v247
      %v349 = vpop.f32.mrf.mxu0
      %v350 = vadd.f32 0.0, %v349
      %v351 = vpop.f32.mrf.mxu0
      %352 = vmatprep.mubr.f32.mxu0 0.0
      %353 = vmatmul.mubr.f32.gmra.mxu0 %v248
      %v354 = vpop.f32.mrf.mxu0
      %v355 = vadd.f32 0.0, %v354
      %v356 = vpop.f32.mrf.mxu0
      %357 = vmatprep.mubr.f32.mxu0 0.0
      %358 = vmatmul.mubr.f32.gmra.mxu0 %v249
      %v359 = vpop.f32.mrf.mxu0
      %v360 = vadd.f32 0.0, %v359
      %v361 = vpop.f32.mrf.mxu0
      %362 = vmatprep.mubr.f32.mxu0 0.0
      %363 = vmatmul.mubr.f32.gmra.mxu0 %v250
      %v364 = vpop.f32.mrf.mxu0
      %v365 = vadd.f32 0.0, %v364
      %v366 = vpop.f32.mrf.mxu0
      %367 = vmatprep.mubr.f32.mxu0 0.0
      %368 = vmatmul.mubr.f32.gmra.mxu0 %v251
      %v369 = vpop.f32.mrf.mxu0
      %v370 = vadd.f32 0.0, %v369
      %v371 = vpop.f32.mrf.mxu0
      %372 = vdwg.mxu0
      %v373 = vld [vmem:[%s233] sm:$0x1]
      %v375 = vlaneseq
      %v376 = vshrl.u32 %v375, 7
      %v377 = vsub.s32 0, %v376
      %v378 = vrot.slane %v373, %v377
      %v380 = vmul.f32 %v335, %v378
      %v381 = vmul.f32 %v340, %v378
      %v382 = vmul.f32 %v345, %v378
      %v383 = vmul.f32 %v350, %v378
      %v384 = vmul.f32 %v355, %v378
      %v385 = vmul.f32 %v360, %v378
      %v386 = vmul.f32 %v365, %v378
      %v387 = vmul.f32 %v370, %v378
      %vm388 = vcmask 523264
      %389 = vst.msk [vmem:[%s242] sm:$0xff] %vm388, %v380
      %390 = vst.msk [vmem:[%s242 + $0x8] sm:$0xff] %vm388, %v381
      %391 = vst.msk [vmem:[%s242 + $0x10] sm:$0xff] %vm388, %v382
      %392 = vst.msk [vmem:[%s242 + $0x18] sm:$0xff] %vm388, %v383
      %393 = vst.msk [vmem:[%s242 + $0x20] sm:$0xff] %vm388, %v384
      %394 = vst.msk [vmem:[%s242 + $0x28] sm:$0xff] %vm388, %v385
      %395 = vst.msk [vmem:[%s242 + $0x30] sm:$0xff] %vm388, %v386
      %396 = vst.msk [vmem:[%s242 + $0x38] sm:$0xff] %vm388, %v387
      %s397 = smul.u32 8, %s19
      %p398 = scmp.lt.s32.totalorder %s18, 1
      %s399 = scalar_select %p398, %s18, 1
      %p400 = scmp.lt.s32.totalorder %s397, 7
      %s401 = scalar_select %p400, %s397, 7
      %s402 = smul.addr %s399, 8
      %s403 = sadd.s32 %s401, %s402
      %s404 = smul.addr %s403, 8
      %s405 = scalar_lea.vmem %s3, %s404
      // Predicated region
      $region33: #{_lambda_.3} parent=31 // pred_check
        %p406 = pneg %p126
      $region34: #{_lambda_.3} parent=31 // pred_check_branch
        %408 = sbr.rel (%p406) target = $region36
      $region35: #{_lambda_.3} parent=31 // pred_region
        %s409 = smul.u32 8, %s19
      $region36: #{_lambda_.3} parent=31 // pred_fallthru
        _
    $region32: #{_lambda_.3} parent=5 // pred_fallthru
      _
    %p410 = scmp.le.s32.totalorder 2, %s9
    // Predicated region
    $region37: #{_lambda_.3} parent=5 // pred_check
      %p411 = pneg %p410
    $region38: #{_lambda_.3} parent=5 // pred_check_branch
      %413 = sbr.rel (%p411) target = $region40
    $region39: #{_lambda_.3} parent=5 // pred_region
      %s414 = ssub.s32 %s9, 2
      // Predicated region
      $region41: #{_lambda_.3} parent=39 // pred_check
        %p415 = pneg %p132
      $region42: #{_lambda_.3} parent=39 // pred_check_branch
        %417 = sbr.rel (%p415) target = $region44
      $region43: #{_lambda_.3} parent=39 // pred_region
        %s418 = smul.u32 8, %s21
        %p419 = scmp.lt.s32.totalorder %s20, 1
        %s420 = scalar_select %p419, %s20, 1
        %p421 = scmp.lt.s32.totalorder %s418, 7
        %s422 = scalar_select %p421, %s418, 7
        %s423 = smul.addr %s420, 8
        %s424 = sadd.s32 %s422, %s423
        %s425 = smul.addr %s424, 8
        %s426 = scalar_lea.vmem %s3, %s425
      $region44: #{_lambda_.3} parent=39 // pred_fallthru
        _
    $region40: #{_lambda_.3} parent=5 // pred_fallthru
      _
  $region6: #{_lambda_.3} parent=0 // loop_footer
    %s13 = sadd.s32 1, %s9
  $region7: #{_lambda_.3} parent=0 // loop_footer_branch
    %8 = sbr.rel target = $region3
  $region8: #{_lambda_.3} parent=0 // loop_exit
    _

// kernel: _lambda_.4
$region0: #{_lambda_.4}
  #allocation0 [shape = 'u32[]', space=smem, size = 0x4, offset = 0x4, fixed_abs, tag = 'smem constant byte address 0x4 - core index']
  #allocation1 [shape = 'u32[144,128]{1,0:T(1,128)}', space=vmem, size = 0x12000, scoped, tag = 'internal scratch']
  %s0 = inlined_call_operand.vmem [shape: f32[2,66,66], index: 0, kind: input, shape index: {}]
  %s1 = inlined_call_operand.vmem [shape: f32[2,64,64], index: 1, kind: output, shape index: {}]
  %s2 = sld [smem:[#allocation0]]
  $region37: #{_lambda_.4} parent=0
    _
  %s4 = ssub.s32 1, %s2
  %s5 = scalar_select 0, %s4, %s2
  loop: start=0, step=1, limit=4
  $region2: #{_lambda_.4} parent=0 // loop_pre_header
    _
  $region3: #{_lambda_.4} parent=0 // loop_header
    %s7 = sphi 0, %s11
    %p8 = scmp.ge.s32.totalorder %s7, 4
    %s17 = sphi 0, %s19
    %s20 = sphi 0, %s17
    %s21 = sphi 0, %s20
    %s37 = sphi 0, %s21
    %s43 = sphi 0, %s45
    %s46 = sphi 0, %s43
    %s47 = sphi 0, %s46
    %s63 = sphi 0, %s47
  $region4: #{_lambda_.4} parent=0 // loop_header_branch
    %10 = sbr.rel (%p8) target = $region8
  $region5: #{_lambda_.4} parent=0 // loop_body
    %s12 = ssub.s32 %s7, 1
    %s13 = ssub.s32 %s7, 2
    %s14 = sadd.s32 %s7, 1
    %s15 = ssub.s32 %s7, %s14
    %p16 = scmp.eq.s32.totalorder %s15, 0
    %s18 = sadd.s32 %s17, 1
    %s19 = scalar_select %p16, %s17, %s18
    %p22 = pneg %p16
    %p23 = scmp.eq.s32.totalorder %s7, 1
    %p24 = por %p22, %p23
    %p25 = scmp.ne.s32.totalorder %s17, %s20
    %p26 = scmp.eq.s32.totalorder %s7, 0
    %p27 = por %p25, %p26
    %p28 = scmp.ne.s32.totalorder %s17, %s20
    %p29 = scmp.eq.s32.totalorder %s12, 1
    %p30 = por %p28, %p29
    %p31 = scmp.ne.s32.totalorder %s20, %s21
    %p32 = scmp.eq.s32.totalorder %s12, 0
    %p33 = por %p31, %p32
    %p34 = scmp.ne.s32.totalorder %s20, %s21
    %p35 = scmp.eq.s32.totalorder %s13, 1
    %p36 = por %p34, %p35
    %p38 = scmp.ne.s32.totalorder %s21, %s37
    %p39 = scmp.eq.s32.totalorder %s13, 0
    %p40 = por %p38, %p39
    %s41 = ssub.s32 %s7, %s14
    %p42 = scmp.eq.s32.totalorder %s41, 0
    %s44 = sadd.s32 %s43, 1
    %s45 = scalar_select %p42, %s43, %s44
    %p48 = pneg %p42
    %p49 = scmp.eq.s32.totalorder %s7, 1
    %p50 = por %p48, %p49
    %p51 = scmp.ne.s32.totalorder %s43, %s46
    %p52 = scmp.eq.s32.totalorder %s7, 0
    %p53 = por %p51, %p52
    %p54 = scmp.ne.s32.totalorder %s43, %s46
    %p55 = scmp.eq.s32.totalorder %s12, 1
    %p56 = por %p54, %p55
    %p57 = scmp.ne.s32.totalorder %s46, %s47
    %p58 = scmp.eq.s32.totalorder %s12, 0
    %p59 = por %p57, %p58
    %p60 = scmp.ne.s32.totalorder %s46, %s47
    %p61 = scmp.eq.s32.totalorder %s13, 1
    %p62 = por %p60, %p61
    %p64 = scmp.ne.s32.totalorder %s47, %s63
    %p65 = scmp.eq.s32.totalorder %s13, 0
    %p66 = por %p64, %p65
    %p67 = scmp.le.s32.totalorder 1, %s7
    %p68 = scmp.lt.s32.totalorder %s7, 3
    %p69 = pnand %p67, %p68
    %p70 = pneg %p69
    // Predicated region
    $region9: #{_lambda_.4} parent=5 // pred_check
      _
    $region10: #{_lambda_.4} parent=5 // pred_check_branch
      %72 = sbr.rel (%p69) target = $region12
    $region11: #{_lambda_.4} parent=5 // pred_region
      %s73 = ssub.s32 %s7, 1
    $region12: #{_lambda_.4} parent=5 // pred_fallthru
      _
    %p74 = scmp.lt.s32.totalorder %s7, 2
    // Predicated region
    $region13: #{_lambda_.4} parent=5 // pred_check
      %p75 = pneg %p74
    $region14: #{_lambda_.4} parent=5 // pred_check_branch
      %77 = sbr.rel (%p75) target = $region16
    $region15: #{_lambda_.4} parent=5 // pred_region
      // Predicated region
      $region17: #{_lambda_.4} parent=15 // pred_check
        %p78 = pneg %p27
      $region18: #{_lambda_.4} parent=15 // pred_check_branch
        %80 = sbr.rel (%p78) target = $region20
      $region19: #{_lambda_.4} parent=15 // pred_region
        %p81 = scmp.lt.s32.totalorder %s7, 1
        %s82 = scalar_select %p81, %s7, 1
        %s83 = smul.addr %s82, 9
        %s84 = smul.addr %s83, 8
        %s85 = scalar_lea.vmem %s0, %s84
      $region20: #{_lambda_.4} parent=15 // pred_fallthru
        _
    $region16: #{_lambda_.4} parent=5 // pred_fallthru
      _
    %p86 = scmp.le.s32.totalorder 1, %s7
    %p87 = scmp.lt.s32.totalorder %s7, 3
    %p88 = pnand %p86, %p87
    %p89 = pneg %p88
    // Predicated region
    $region21: #{_lambda_.4} parent=5 // pred_check
      _
    $region22: #{_lambda_.4} parent=5 // pred_check_branch
      %91 = sbr.rel (%p88) target = $region24
    $region23: #{_lambda_.4} parent=5 // pred_region
      %s92 = ssub.s32 %s7, 1
      %p93 = scmp.lt.s32.totalorder %s12, 1
      %s94 = scalar_select %p93, %s12, 1
      %s95 = smul.addr %s94, 9
      %s96 = smul.addr %s95, 8
      %s97 = scalar_lea.vmem %s0, %s96
      %p98 = pneg %p33
      %p99 = pneg %p30
      %p100 = pneg %p59
      %p101 = pneg %p56
      %p102 = scmp.lt.s32.totalorder %s12, 1
      %s103 = scalar_select %p102, %s12, 1
      %s104 = smul.addr %s103, 8
      %s105 = smul.addr %s104, 8
      %s106 = scalar_lea.vmem %s1, %s105
      %p107 = scmp.lt.s32.totalorder %s12, 1
      %s108 = scalar_select %p107, %s12, 1
      %s109 = smul.addr %s108, 9
      %s110 = smul.addr %s109, 8
      %s111 = scalar_lea.vmem %s0, %s110
      %p112 = scmp.lt.s32.totalorder %s12, 1
      %s113 = scalar_select %p112, %s12, 1
      %s114 = smul.addr %s113, 8
      %s115 = smul.addr %s114, 8
      %s116 = scalar_lea.vmem %s1, %s115
      %v117 = vld [vmem:[%s111 + $0x1] sm:$0xff]
      %v118 = vld [vmem:[%s111 + $0x9] sm:$0xff]
      %v119 = vld [vmem:[%s111 + $0x11] sm:$0xff]
      %v120 = vld [vmem:[%s111 + $0x19] sm:$0xff]
      %v121 = vld [vmem:[%s111 + $0x21] sm:$0xff]
      %v122 = vld [vmem:[%s111 + $0x29] sm:$0xff]
      %v123 = vld [vmem:[%s111 + $0x31] sm:$0xff]
      %v124 = vld [vmem:[%s111 + $0x39] sm:$0xff]
      %v125 = vld [vmem:[%s111] sm:$0xff]
      %v126 = vld [vmem:[%s111 + $0x8] sm:$0xff]
      %v127 = vld [vmem:[%s111 + $0x10] sm:$0xff]
      %v128 = vld [vmem:[%s111 + $0x18] sm:$0xff]
      %v129 = vld [vmem:[%s111 + $0x20] sm:$0xff]
      %v130 = vld [vmem:[%s111 + $0x28] sm:$0xff]
      %v131 = vld [vmem:[%s111 + $0x30] sm:$0xff]
      %v132 = vld [vmem:[%s111 + $0x38] sm:$0xff]
      %141 = vrot.lane.b32.xlu0 %v125, 1
      %v142 = vpop.permute.xlu0 %141
      %143 = vrot.lane.b32.xlu0 %v126, 1
      %v144 = vpop.permute.xlu0 %143
      %145 = vrot.lane.b32.xlu0 %v127, 1
      %v146 = vpop.permute.xlu0 %145
      %147 = vrot.lane.b32.xlu0 %v128, 1
      %v148 = vpop.permute.xlu0 %147
      %149 = vrot.lane.b32.xlu0 %v129, 1
      %v150 = vpop.permute.xlu0 %149
      %151 = vrot.lane.b32.xlu0 %v130, 1
      %v152 = vpop.permute.xlu0 %151
      %153 = vrot.lane.b32.xlu0 %v131, 1
      %v154 = vpop.permute.xlu0 %153
      %155 = vrot.lane.b32.xlu0 %v132, 1
      %v156 = vpop.permute.xlu0 %155
      %v165 = vadd.f32 %v117, %v142
      %v166 = vadd.f32 %v118, %v144
      %v167 = vadd.f32 %v119, %v146
      %v168 = vadd.f32 %v120, %v148
      %v169 = vadd.f32 %v121, %v150
      %v170 = vadd.f32 %v122, %v152
      %v171 = vadd.f32 %v123, %v154
      %v172 = vadd.f32 %v124, %v156
      %v173 = vld [vmem:[%s111 + $0x2] sm:$0xff]
      %v174 = vld [vmem:[%s111 + $0xa] sm:$0xff]
      %v175 = vld [vmem:[%s111 + $0x12] sm:$0xff]
      %v176 = vld [vmem:[%s111 + $0x1a] sm:$0xff]
      %v177 = vld [vmem:[%s111 + $0x22] sm:$0xff]
      %v178 = vld [vmem:[%s111 + $0x2a] sm:$0xff]
      %v179 = vld [vmem:[%s111 + $0x32] sm:$0xff]
      %v180 = vld [vmem:[%s111 + $0x3a] sm:$0xff]
      %189 = vrot.lane.b32.xlu0 %v173, 127
      %v190 = vpop.permute.xlu0 %189
      %191 = vrot.lane.b32.xlu0 %v174, 127
      %v192 = vpop.permute.xlu0 %191
      %193 = vrot.lane.b32.xlu0 %v175, 127
      %v194 = vpop.permute.xlu0 %193
      %195 = vrot.lane.b32.xlu0 %v176, 127
      %v196 = vpop.permute.xlu0 %195
      %197 = vrot.lane.b32.xlu0 %v177, 127
      %v198 = vpop.permute.xlu0 %197
      %199 = vrot.lane.b32.xlu0 %v178, 127
      %v200 = vpop.permute.xlu0 %199
      %201 = vrot.lane.b32.xlu0 %v179, 127
      %v202 = vpop.permute.xlu0 %201
      %203 = vrot.lane.b32.xlu0 %v180, 127
      %v204 = vpop.permute.xlu0 %203
      %v213 = vadd.f32 %v165, %v190
      %v214 = vadd.f32 %v166, %v192
      %v215 = vadd.f32 %v167, %v194
      %v216 = vadd.f32 %v168, %v196
      %v217 = vadd.f32 %v169, %v198
      %v218 = vadd.f32 %v170, %v200
      %v219 = vadd.f32 %v171, %v202
      %v220 = vadd.f32 %v172, %v204
      %229 = vrot.lane.b32.xlu0 %v213, 127
      %v230 = vpop.permute.xlu0 %229
      %231 = vrot.lane.b32.xlu0 %v214, 127
      %v232 = vpop.permute.xlu0 %231
      %233 = vrot.lane.b32.xlu0 %v215, 127
      %v234 = vpop.permute.xlu0 %233
      %235 = vrot.lane.b32.xlu0 %v216, 127
      %v236 = vpop.permute.xlu0 %235
      %237 = vrot.lane.b32.xlu0 %v217, 127
      %v238 = vpop.permute.xlu0 %237
      %239 = vrot.lane.b32.xlu0 %v218, 127
      %v240 = vpop.permute.xlu0 %239
      %241 = vrot.lane.b32.xlu0 %v219, 127
      %v242 = vpop.permute.xlu0 %241
      %243 = vrot.lane.b32.xlu0 %v220, 127
      %v244 = vpop.permute.xlu0 %243
      %vm253 = vcmask 523264
      %254 = vst.msk [vmem:[%s116] sm:$0xff] %vm253, %v230
      %255 = vst.msk [vmem:[%s116 + $0x8] sm:$0xff] %vm253, %v232
      %256 = vst.msk [vmem:[%s116 + $0x10] sm:$0xff] %vm253, %v234
      %257 = vst.msk [vmem:[%s116 + $0x18] sm:$0xff] %vm253, %v236
      %258 = vst.msk [vmem:[%s116 + $0x20] sm:$0xff] %vm253, %v238
      %259 = vst.msk [vmem:[%s116 + $0x28] sm:$0xff] %vm253, %v240
      %260 = vst.msk [vmem:[%s116 + $0x30] sm:$0xff] %vm253, %v242
      %261 = vst.msk [vmem:[%s116 + $0x38] sm:$0xff] %vm253, %v244
      %p262 = scmp.lt.s32.totalorder %s12, 1
      %s263 = scalar_select %p262, %s12, 1
      %s264 = smul.addr %s263, 8
      %s265 = smul.addr %s264, 8
      %s266 = scalar_lea.vmem %s1, %s265
      // Predicated region
      $region25: #{_lambda_.4} parent=23 // pred_check
        %p267 = pneg %p56
      $region26: #{_lambda_.4} parent=23 // pred_check_branch
        %269 = sbr.rel (%p267) target = $region28
      $region27: #{_lambda_.4} parent=23 // pred_region
        _
      $region28: #{_lambda_.4} parent=23 // pred_fallthru
        _
    $region24: #{_lambda_.4} parent=5 // pred_fallthru
      _
    %p270 = scmp.le.s32.totalorder 2, %s7
    // Predicated region
    $region29: #{_lambda_.4} parent=5 // pred_check
      %p271 = pneg %p270
    $region30: #{_lambda_.4} parent=5 // pred_check_branch
      %273 = sbr.rel (%p271) target = $region32
    $region31: #{_lambda_.4} parent=5 // pred_region
      %s274 = ssub.s32 %s7, 2
      // Predicated region
      $region33: #{_lambda_.4} parent=31 // pred_check
        %p275 = pneg %p62
      $region34: #{_lambda_.4} parent=31 // pred_check_branch
        %277 = sbr.rel (%p275) target = $region36
      $region35: #{_lambda_.4} parent=31 // pred_region
        %p278 = scmp.lt.s32.totalorder %s13, 1
        %s279 = scalar_select %p278, %s13, 1
        %s280 = smul.addr %s279, 8
        %s281 = smul.addr %s280, 8
        %s282 = scalar_lea.vmem %s1, %s281
      $region36: #{_lambda_.4} parent=31 // pred_fallthru
        _
    $region32: #{_lambda_.4} parent=5 // pred_fallthru
      _
  $region6: #{_lambda_.4} parent=0 // loop_footer
    %s11 = sadd.s32 1, %s7
  $region7: #{_lambda_.4} parent=0 // loop_footer_branch
    %6 = sbr.rel target = $region3
  $region8: #{_lambda_.4} parent=0 // loop_exit
    _

// kernel: _lambda_.5
$region0: #{_lambda_.5}
  #allocation0 [shape = 'u32[]', space=smem, size = 0x4, offset = 0x4, fixed_abs, tag = 'smem constant byte address 0x4 - core index']
  #allocation1 [shape = 'u32[144,128]{1,0:T(1,128)}', space=vmem, size = 0x12000, scoped, tag = 'internal scratch']
  #allocation2 [shape = 'f32[64,64]{1,0:T(8,128)}', space=vmem, size = 0x8000, scoped, tag = 'scratch operand']
  %s0 = inlined_call_operand.vmem [shape: f32[2,66,66], index: 0, kind: input, shape index: {}]
  %s1 = inlined_call_operand.vmem [shape: f32[2,64,64], index: 1, kind: input, shape index: {}]
  %s2 = inlined_call_operand.vmem [shape: f32[2,64,64], index: 2, kind: output, shape index: {}]
  %s3 = sld [smem:[#allocation0]]
  $region45: #{_lambda_.5} parent=0
    _
  %s5 = ssub.s32 1, %s3
  %s6 = scalar_select 0, %s5, %s3
  loop: start=0, step=1, limit=4
  $region2: #{_lambda_.5} parent=0 // loop_pre_header
    _
  $region3: #{_lambda_.5} parent=0 // loop_header
    %s8 = sphi 0, %s12
    %p9 = scmp.ge.s32.totalorder %s8, 4
    %s15 = sphi 0, %s27
    %s16 = sphi 0, %s23
    %s17 = sphi 0, %s15
    %s18 = sphi 0, %s16
    %s19 = sphi 0, %s17
    %s20 = sphi 0, %s18
    %s30 = sphi 0, %s32
    %s33 = sphi 0, %s30
    %s34 = sphi 0, %s33
    %s50 = sphi 0, %s34
    %s58 = sphi 0, %s60
    %s61 = sphi 0, %s58
    %s62 = sphi 0, %s61
    %s78 = sphi 0, %s62
    %s86 = sphi 0, %s88
    %s89 = sphi 0, %s86
    %s90 = sphi 0, %s89
    %s106 = sphi 0, %s90
  $region4: #{_lambda_.5} parent=0 // loop_header_branch
    %11 = sbr.rel (%p9) target = $region8
  $region5: #{_lambda_.5} parent=0 // loop_body
    %s13 = ssub.s32 %s8, 1
    %s14 = ssub.s32 %s8, 2
    %s21 = sadd.s32 1, %s16
    %p22 = scmp.ge.s32.totalorder %s21, 1
    %s23 = scalar_select %p22, 0, %s21
    %s24 = sadd.s32 1, %s15
    %s25 = scalar_select %p22, %s24, %s15
    %p26 = scmp.ge.s32.totalorder %s25, 2
    %s27 = scalar_select %p26, 0, %s25
    %s28 = ssub.s32 %s15, %s27
    %p29 = scmp.eq.s32.totalorder %s28, 0
    %s31 = sadd.s32 %s30, 1
    %s32 = scalar_select %p29, %s30, %s31
    %p35 = pneg %p29
    %p36 = scmp.eq.s32.totalorder %s8, 1
    %p37 = por %p35, %p36
    %p38 = scmp.ne.s32.totalorder %s30, %s33
    %p39 = scmp.eq.s32.totalorder %s8, 0
    %p40 = por %p38, %p39
    %p41 = scmp.ne.s32.totalorder %s30, %s33
    %p42 = scmp.eq.s32.totalorder %s13, 1
    %p43 = por %p41, %p42
    %p44 = scmp.ne.s32.totalorder %s33, %s34
    %p45 = scmp.eq.s32.totalorder %s13, 0
    %p46 = por %p44, %p45
    %p47 = scmp.ne.s32.totalorder %s33, %s34
    %p48 = scmp.eq.s32.totalorder %s14, 1
    %p49 = por %p47, %p48
    %p51 = scmp.ne.s32.totalorder %s34, %s50
    %p52 = scmp.eq.s32.totalorder %s14, 0
    %p53 = por %p51, %p52
    %s54 = ssub.s32 %s15, %s27
    %s55 = ssub.s32 %s16, %s23
    %s56 = sor.u32 %s54, %s55
    %p57 = scmp.eq.s32.totalorder %s56, 0
    %s59 = sadd.s32 %s58, 1
    %s60 = scalar_select %p57, %s58, %s59
    %p63 = pneg %p57
    %p64 = scmp.eq.s32.totalorder %s8, 1
    %p65 = por %p63, %p64
    %p66 = scmp.ne.s32.totalorder %s58, %s61
    %p67 = scmp.eq.s32.totalorder %s8, 0
    %p68 = por %p66, %p67
    %p69 = scmp.ne.s32.totalorder %s58, %s61
    %p70 = scmp.eq.s32.totalorder %s13, 1
    %p71 = por %p69, %p70
    %p72 = scmp.ne.s32.totalorder %s61, %s62
    %p73 = scmp.eq.s32.totalorder %s13, 0
    %p74 = por %p72, %p73
    %p75 = scmp.ne.s32.totalorder %s61, %s62
    %p76 = scmp.eq.s32.totalorder %s14, 1
    %p77 = por %p75, %p76
    %p79 = scmp.ne.s32.totalorder %s62, %s78
    %p80 = scmp.eq.s32.totalorder %s14, 0
    %p81 = por %p79, %p80
    %s82 = ssub.s32 %s15, %s27
    %s83 = ssub.s32 %s16, %s23
    %s84 = sor.u32 %s82, %s83
    %p85 = scmp.eq.s32.totalorder %s84, 0
    %s87 = sadd.s32 %s86, 1
    %s88 = scalar_select %p85, %s86, %s87
    %p91 = pneg %p85
    %p92 = scmp.eq.s32.totalorder %s8, 1
    %p93 = por %p91, %p92
    %p94 = scmp.ne.s32.totalorder %s86, %s89
    %p95 = scmp.eq.s32.totalorder %s8, 0
    %p96 = por %p94, %p95
    %p97 = scmp.ne.s32.totalorder %s86, %s89
    %p98 = scmp.eq.s32.totalorder %s13, 1
    %p99 = por %p97, %p98
    %p100 = scmp.ne.s32.totalorder %s89, %s90
    %p101 = scmp.eq.s32.totalorder %s13, 0
    %p102 = por %p100, %p101
    %p103 = scmp.ne.s32.totalorder %s89, %s90
    %p104 = scmp.eq.s32.totalorder %s14, 1
    %p105 = por %p103, %p104
    %p107 = scmp.ne.s32.totalorder %s90, %s106
    %p108 = scmp.eq.s32.totalorder %s14, 0
    %p109 = por %p107, %p108
    %p110 = scmp.le.s32.totalorder 1, %s8
    %p111 = scmp.lt.s32.totalorder %s8, 3
    %p112 = pnand %p110, %p111
    %p113 = pneg %p112
    // Predicated region
    $region9: #{_lambda_.5} parent=5 // pred_check
      _
    $region10: #{_lambda_.5} parent=5 // pred_check_branch
      %115 = sbr.rel (%p112) target = $region12
    $region11: #{_lambda_.5} parent=5 // pred_region
      %s116 = ssub.s32 %s8, 1
    $region12: #{_lambda_.5} parent=5 // pred_fallthru
      _
    %p117 = scmp.lt.s32.totalorder %s8, 2
    // Predicated region
    $region13: #{_lambda_.5} parent=5 // pred_check
      %p118 = pneg %p117
    $region14: #{_lambda_.5} parent=5 // pred_check_branch
      %120 = sbr.rel (%p118) target = $region16
    $region15: #{_lambda_.5} parent=5 // pred_region
      // Predicated region
      $region17: #{_lambda_.5} parent=15 // pred_check
        %p121 = pneg %p40
      $region18: #{_lambda_.5} parent=15 // pred_check_branch
        %123 = sbr.rel (%p121) target = $region20
      $region19: #{_lambda_.5} parent=15 // pred_region
        %p124 = scmp.lt.s32.totalorder %s15, 1
        %s125 = scalar_select %p124, %s15, 1
        %s126 = smul.addr %s125, 9
        %s127 = smul.addr %s126, 8
        %s128 = scalar_lea.vmem %s0, %s127
      $region20: #{_lambda_.5} parent=15 // pred_fallthru
        _
      // Predicated region
      $region21: #{_lambda_.5} parent=15 // pred_check
        %p129 = pneg %p68
      $region22: #{_lambda_.5} parent=15 // pred_check_branch
        %131 = sbr.rel (%p129) target = $region24
      $region23: #{_lambda_.5} parent=15 // pred_region
        %p132 = scmp.lt.s32.totalorder %s15, 1
        %s133 = scalar_select %p132, %s15, 1
        %p134 = scmp.lt.s32.totalorder %s16, 0
        %s135 = scalar_select %p134, %s16, 0
        %s136 = smul.addr %s133, 8
        %s137 = sadd.s32 %s135, %s136
        %s138 = smul.addr %s137, 8
        %s139 = scalar_lea.vmem %s1, %s138
      $region24: #{_lambda_.5} parent=15 // pred_fallthru
        _
    $region16: #{_lambda_.5} parent=5 // pred_fallthru
      _
    %p140 = scmp.le.s32.totalorder 1, %s8
    %p141 = scmp.lt.s32.totalorder %s8, 3
    %p142 = pnand %p140, %p141
    %p143 = pneg %p142
    // Predicated region
    $region25: #{_lambda_.5} parent=5 // pred_check
      _
    $region26: #{_lambda_.5} parent=5 // pred_check_branch
      %145 = sbr.rel (%p142) target = $region28
    $region27: #{_lambda_.5} parent=5 // pred_region
      %s146 = ssub.s32 %s8, 1
      %p147 = scmp.lt.s32.totalorder %s17, 1
      %s148 = scalar_select %p147, %s17, 1
      %s149 = smul.addr %s148, 9
      %s150 = smul.addr %s149, 8
      %s151 = scalar_lea.vmem %s0, %s150
      %p152 = pneg %p46
      %p153 = pneg %p43
      %p154 = scmp.lt.s32.totalorder %s17, 1
      %s155 = scalar_select %p154, %s17, 1
      %p156 = scmp.lt.s32.totalorder %s18, 0
      %s157 = scalar_select %p156, %s18, 0
      %s158 = smul.addr %s155, 8
      %s159 = sadd.s32 %s157, %s158
      %s160 = smul.addr %s159, 8
      %s161 = scalar_lea.vmem %s1, %s160
      %p162 = pneg %p74
      %p163 = pneg %p71
      %p164 = pneg %p102
      %p165 = pneg %p99
      %p166 = scmp.lt.s32.totalorder %s17, 1
      %s167 = scalar_select %p166, %s17, 1
      %p168 = scmp.lt.s32.totalorder %s18, 0
      %s169 = scalar_select %p168, %s18, 0
      %s170 = smul.addr %s167, 8
      %s171 = sadd.s32 %s169, %s170
      %s172 = smul.addr %s171, 8
      %s173 = scalar_lea.vmem %s2, %s172
      %p174 = scmp.lt.s32.totalorder %s17, 1
      %s175 = scalar_select %p174, %s17, 1
      %s176 = smul.addr %s175, 9
      %s177 = smul.addr %s176, 8
      %s178 = scalar_lea.vmem %s0, %s177
      %p179 = scmp.lt.s32.totalorder %s17, 1
      %s180 = scalar_select %p179, %s17, 1
      %p181 = scmp.lt.s32.totalorder %s18, 0
      %s182 = scalar_select %p181, %s18, 0
      %s183 = smul.addr %s180, 8
      %s184 = sadd.s32 %s182, %s183
      %s185 = smul.addr %s184, 8
      %s186 = scalar_lea.vmem %s1, %s185
      %p187 = scmp.lt.s32.totalorder %s17, 1
      %s188 = scalar_select %p187, %s17, 1
      %p189 = scmp.lt.s32.totalorder %s18, 0
      %s190 = scalar_select %p189, %s18, 0
      %s191 = smul.addr %s188, 8
      %s192 = sadd.s32 %s190, %s191
      %s193 = smul.addr %s192, 8
      %s194 = scalar_lea.vmem %s2, %s193
      %p195 = scmp.eq.s32.totalorder %s18, 0
      // Predicated region
      $region29: #{_lambda_.5} parent=27 // pred_check
        %p196 = pneg %p195
      $region30: #{_lambda_.5} parent=27 // pred_check_branch
        %198 = sbr.rel (%p196) target = $region32
      $region31: #{_lambda_.5} parent=27 // pred_region
        %v199 = vld [vmem:[%s178 + $0x1] sm:$0xff]
        %v200 = vld [vmem:[%s178 + $0x9] sm:$0xff]
        %v201 = vld [vmem:[%s178 + $0x11] sm:$0xff]
        %v202 = vld [vmem:[%s178 + $0x19] sm:$0xff]
        %v203 = vld [vmem:[%s178 + $0x21] sm:$0xff]
        %v204 = vld [vmem:[%s178 + $0x29] sm:$0xff]
        %v205 = vld [vmem:[%s178 + $0x31] sm:$0xff]
        %v206 = vld [vmem:[%s178 + $0x39] sm:$0xff]
        %v207 = vld [vmem:[%s178] sm:$0xff]
        %v208 = vld [vmem:[%s178 + $0x8] sm:$0xff]
        %v209 = vld [vmem:[%s178 + $0x10] sm:$0xff]
        %v210 = vld [vmem:[%s178 + $0x18] sm:$0xff]
        %v211 = vld [vmem:[%s178 + $0x20] sm:$0xff]
        %v212 = vld [vmem:[%s178 + $0x28] sm:$0xff]
        %v213 = vld [vmem:[%s178 + $0x30] sm:$0xff]
        %v214 = vld [vmem:[%s178 + $0x38] sm:$0xff]
        %223 = vrot.lane.b32.xlu0 %v207, 1
        %v224 = vpop.permute.xlu0 %223
        %225 = vrot.lane.b32.xlu0 %v208, 1
        %v226 = vpop.permute.xlu0 %225
        %227 = vrot.lane.b32.xlu0 %v209, 1
        %v228 = vpop.permute.xlu0 %227
        %229 = vrot.lane.b32.xlu0 %v210, 1
        %v230 = vpop.permute.xlu0 %229
        %231 = vrot.lane.b32.xlu0 %v211, 1
        %v232 = vpop.permute.xlu0 %231
        %233 = vrot.lane.b32.xlu0 %v212, 1
        %v234 = vpop.permute.xlu0 %233
        %235 = vrot.lane.b32.xlu0 %v213, 1
        %v236 = vpop.permute.xlu0 %235
        %237 = vrot.lane.b32.xlu0 %v214, 1
        %v238 = vpop.permute.xlu0 %237
        %v247 = vadd.f32 %v199, %v224
        %v248 = vadd.f32 %v200, %v226
        %v249 = vadd.f32 %v201, %v228
        %v250 = vadd.f32 %v202, %v230
        %v251 = vadd.f32 %v203, %v232
        %v252 = vadd.f32 %v204, %v234
        %v253 = vadd.f32 %v205, %v236
        %v254 = vadd.f32 %v206, %v238
        %v255 = vld [vmem:[%s178 + $0x2] sm:$0xff]
        %v256 = vld [vmem:[%s178 + $0xa] sm:$0xff]
        %v257 = vld [vmem:[%s178 + $0x12] sm:$0xff]
        %v258 = vld [vmem:[%s178 + $0x1a] sm:$0xff]
        %v259 = vld [vmem:[%s178 + $0x22] sm:$0xff]
        %v260 = vld [vmem:[%s178 + $0x2a] sm:$0xff]
        %v261 = vld [vmem:[%s178 + $0x32] sm:$0xff]
        %v262 = vld [vmem:[%s178 + $0x3a] sm:$0xff]
        %271 = vrot.lane.b32.xlu0 %v255, 127
        %v272 = vpop.permute.xlu0 %271
        %273 = vrot.lane.b32.xlu0 %v256, 127
        %v274 = vpop.permute.xlu0 %273
        %275 = vrot.lane.b32.xlu0 %v257, 127
        %v276 = vpop.permute.xlu0 %275
        %277 = vrot.lane.b32.xlu0 %v258, 127
        %v278 = vpop.permute.xlu0 %277
        %279 = vrot.lane.b32.xlu0 %v259, 127
        %v280 = vpop.permute.xlu0 %279
        %281 = vrot.lane.b32.xlu0 %v260, 127
        %v282 = vpop.permute.xlu0 %281
        %283 = vrot.lane.b32.xlu0 %v261, 127
        %v284 = vpop.permute.xlu0 %283
        %285 = vrot.lane.b32.xlu0 %v262, 127
        %v286 = vpop.permute.xlu0 %285
        %v295 = vadd.f32 %v247, %v272
        %v296 = vadd.f32 %v248, %v274
        %v297 = vadd.f32 %v249, %v276
        %v298 = vadd.f32 %v250, %v278
        %v299 = vadd.f32 %v251, %v280
        %v300 = vadd.f32 %v252, %v282
        %v301 = vadd.f32 %v253, %v284
        %v302 = vadd.f32 %v254, %v286
        %v303 = vmul.f32 %v295, 10.0
        %v304 = vmul.f32 %v296, 10.0
        %v305 = vmul.f32 %v297, 10.0
        %v306 = vmul.f32 %v298, 10.0
        %v307 = vmul.f32 %v299, 10.0
        %v308 = vmul.f32 %v300, 10.0
        %v309 = vmul.f32 %v301, 10.0
        %v310 = vmul.f32 %v302, 10.0
        %vm311 = vcmask 531464
        %v312 = vsel %vm311, %v303, -inf
        %313 = vmax.xlane.f32.xlu0 %v312
        %v314 = vpop.xlane.xlu0 %313
        %v315 = vsel %vm311, %v304, -inf
        %316 = vmax.xlane.f32.xlu0 %v315
        %v317 = vpop.xlane.xlu0 %316
        %v318 = vsel %vm311, %v305, -inf
        %319 = vmax.xlane.f32.xlu0 %v318
        %v320 = vpop.xlane.xlu0 %319
        %v321 = vsel %vm311, %v306, -inf
        %322 = vmax.xlane.f32.xlu0 %v321
        %v323 = vpop.xlane.xlu0 %322
        %v324 = vsel %vm311, %v307, -inf
        %325 = vmax.xlane.f32.xlu0 %v324
        %v326 = vpop.xlane.xlu0 %325
        %v327 = vsel %vm311, %v308, -inf
        %328 = vmax.xlane.f32.xlu0 %v327
        %v329 = vpop.xlane.xlu0 %328
        %v330 = vsel %vm311, %v309, -inf
        %331 = vmax.xlane.f32.xlu0 %v330
        %v332 = vpop.xlane.xlu0 %331
        %v333 = vsel %vm311, %v310, -inf
        %334 = vmax.xlane.f32.xlu0 %v333
        %v335 = vpop.xlane.xlu0 %334
        %v336 = vsub.f32 %v303, %v314
        %v337 = vsub.f32 %v304, %v317
        %v338 = vsub.f32 %v305, %v320
        %v339 = vsub.f32 %v306, %v323
        %v340 = vsub.f32 %v307, %v326
        %v341 = vsub.f32 %v308, %v329
        %v342 = vsub.f32 %v309, %v332
        %v343 = vsub.f32 %v310, %v335
        %v344 = vmul.f32 %v336, 1.442695
        %v345 = vpow.pop %v344
        %v346 = vmul.f32 %v337, 1.442695
        %v347 = vpow.pop %v346
        %v348 = vmul.f32 %v338, 1.442695
        %v349 = vpow.pop %v348
        %v350 = vmul.f32 %v339, 1.442695
        %v351 = vpow.pop %v350
        %v352 = vmul.f32 %v340, 1.442695
        %v353 = vpow.pop %v352
        %v354 = vmul.f32 %v341, 1.442695
        %v355 = vpow.pop %v354
        %v356 = vmul.f32 %v342, 1.442695
        %v357 = vpow.pop %v356
        %v358 = vmul.f32 %v343, 1.442695
        %v359 = vpow.pop %v358
        %368 = vrot.lane.b32.xlu0 %v345, 127
        %v369 = vpop.permute.xlu0 %368
        %370 = vrot.lane.b32.xlu0 %v347, 127
        %v371 = vpop.permute.xlu0 %370
        %372 = vrot.lane.b32.xlu0 %v349, 127
        %v373 = vpop.permute.xlu0 %372
        %374 = vrot.lane.b32.xlu0 %v351, 127
        %v375 = vpop.permute.xlu0 %374
        %376 = vrot.lane.b32.xlu0 %v353, 127
        %v377 = vpop.permute.xlu0 %376
        %378 = vrot.lane.b32.xlu0 %v355, 127
        %v379 = vpop.permute.xlu0 %378
        %380 = vrot.lane.b32.xlu0 %v357, 127
        %v381 = vpop.permute.xlu0 %380
        %382 = vrot.lane.b32.xlu0 %v359, 127
        %v383 = vpop.permute.xlu0 %382
        %vm392 = vcmask 523264
        %v393 = vsel %vm392, %v369, 0.0
        %394 = vadd.xlane.f32.xlu0 %v393
        %v395 = vpop.xlane.xlu0 %394
        %v396 = vsel %vm392, %v371, 0.0
        %397 = vadd.xlane.f32.xlu0 %v396
        %v398 = vpop.xlane.xlu0 %397
        %v399 = vsel %vm392, %v373, 0.0
        %400 = vadd.xlane.f32.xlu0 %v399
        %v401 = vpop.xlane.xlu0 %400
        %v402 = vsel %vm392, %v375, 0.0
        %403 = vadd.xlane.f32.xlu0 %v402
        %v404 = vpop.xlane.xlu0 %403
        %v405 = vsel %vm392, %v377, 0.0
        %406 = vadd.xlane.f32.xlu0 %v405
        %v407 = vpop.xlane.xlu0 %406
        %v408 = vsel %vm392, %v379, 0.0
        %409 = vadd.xlane.f32.xlu0 %v408
        %v410 = vpop.xlane.xlu0 %409
        %v411 = vsel %vm392, %v381, 0.0
        %412 = vadd.xlane.f32.xlu0 %v411
        %v413 = vpop.xlane.xlu0 %412
        %v414 = vsel %vm392, %v383, 0.0
        %415 = vadd.xlane.f32.xlu0 %v414
        %v416 = vpop.xlane.xlu0 %415
        %v417 = vrcp.pop %v395
        %v418 = vrcp.pop %v398
        %v419 = vrcp.pop %v401
        %v420 = vrcp.pop %v404
        %v421 = vrcp.pop %v407
        %v422 = vrcp.pop %v410
        %v423 = vrcp.pop %v413
        %v424 = vrcp.pop %v416
        %v425 = vmul.f32 %v345, %v417
        %v426 = vmul.f32 %v347, %v418
        %v427 = vmul.f32 %v349, %v419
        %v428 = vmul.f32 %v351, %v420
        %v429 = vmul.f32 %v353, %v421
        %v430 = vmul.f32 %v355, %v422
        %v431 = vmul.f32 %v357, %v423
        %v432 = vmul.f32 %v359, %v424
        %441 = vrot.lane.b32.xlu0 %v425, 127
        %v442 = vpop.permute.xlu0 %441
        %443 = vrot.lane.b32.xlu0 %v426, 127
        %v444 = vpop.permute.xlu0 %443
        %445 = vrot.lane.b32.xlu0 %v427, 127
        %v446 = vpop.permute.xlu0 %445
        %447 = vrot.lane.b32.xlu0 %v428, 127
        %v448 = vpop.permute.xlu0 %447
        %449 = vrot.lane.b32.xlu0 %v429, 127
        %v450 = vpop.permute.xlu0 %449
        %451 = vrot.lane.b32.xlu0 %v430, 127
        %v452 = vpop.permute.xlu0 %451
        %453 = vrot.lane.b32.xlu0 %v431, 127
        %v454 = vpop.permute.xlu0 %453
        %455 = vrot.lane.b32.xlu0 %v432, 127
        %v456 = vpop.permute.xlu0 %455
        %465 = vst.msk [vmem:[#allocation2] sm:$0xff] %vm392, %v442
        %466 = vst.msk [vmem:[#allocation2 + $0x8] sm:$0xff] %vm392, %v444
        %467 = vst.msk [vmem:[#allocation2 + $0x10] sm:$0xff] %vm392, %v446
        %468 = vst.msk [vmem:[#allocation2 + $0x18] sm:$0xff] %vm392, %v448
        %469 = vst.msk [vmem:[#allocation2 + $0x20] sm:$0xff] %vm392, %v450
        %470 = vst.msk [vmem:[#allocation2 + $0x28] sm:$0xff] %vm392, %v452
        %471 = vst.msk [vmem:[#allocation2 + $0x30] sm:$0xff] %vm392, %v454
        %472 = vst.msk [vmem:[#allocation2 + $0x38] sm:$0xff] %vm392, %v456
      $region32: #{_lambda_.5} parent=27 // pred_fallthru
        _
      %v473 = vld [vmem:[#allocation2] sm:$0xff]
      %v474 = vld [vmem:[#allocation2 + $0x8] sm:$0xff]
      %v475 = vld [vmem:[#allocation2 + $0x10] sm:$0xff]
      %v476 = vld [vmem:[#allocation2 + $0x18] sm:$0xff]
      %v477 = vld [vmem:[#allocation2 + $0x20] sm:$0xff]
      %v478 = vld [vmem:[#allocation2 + $0x28] sm:$0xff]
      %v479 = vld [vmem:[#allocation2 + $0x30] sm:$0xff]
      %v480 = vld [vmem:[#allocation2 + $0x38] sm:$0xff]
      %v481 = vld [vmem:[%s186] sm:$0xff]
      %v482 = vld [vmem:[%s186 + $0x8] sm:$0xff]
      %v483 = vld [vmem:[%s186 + $0x10] sm:$0xff]
      %v484 = vld [vmem:[%s186 + $0x18] sm:$0xff]
      %v485 = vld [vmem:[%s186 + $0x20] sm:$0xff]
      %v486 = vld [vmem:[%s186 + $0x28] sm:$0xff]
      %v487 = vld [vmem:[%s186 + $0x30] sm:$0xff]
      %v488 = vld [vmem:[%s186 + $0x38] sm:$0xff]
      %vm489 = vcmask 523264
      %v491 = vsel %vm489, %v473, 0
      %v494 = vsel %vm489, %v474, 0
      %v497 = vsel %vm489, %v475, 0
      %v500 = vsel %vm489, %v476, 0
      %v503 = vsel %vm489, %v477, 0
      %v506 = vsel %vm489, %v478, 0
      %v509 = vsel %vm489, %v479, 0
      %v512 = vsel %vm489, %v480, 0
      %514 = vmatprep.subr.mxu0 0.0
      %515 = vmatpush1.msra.mxu0 0.0
      %516 = vmatprep.subr.mxu0 0.0
      %517 = vmatpush1.msra.mxu0 0.0
      %518 = vmatprep.subr.mxu0 0.0
      %519 = vmatpush1.msra.mxu0 0.0
      %520 = vmatprep.subr.mxu0 0.0
      %521 = vmatpush1.msra.mxu0 0.0
      %522 = vmatprep.subr.mxu0 0.0
      %523 = vmatpush1.msra.mxu0 0.0
      %524 = vmatprep.subr.mxu0 0.0
      %525 = vmatpush1.msra.mxu0 0.0
      %526 = vmatprep.subr.mxu0 0.0
      %527 = vmatpush1.msra.mxu0 0.0
      %528 = vmatprep.subr.mxu0 0.0
      %529 = vmatpush1.msra.mxu0 0.0
      %530 = vmatprep.subr.mxu0 0.0
      %531 = vmatpush1.msra.mxu0 %v488
      %532 = vmatprep.subr.mxu0 0.0
      %533 = vmatpush1.msra.mxu0 %v487
      %534 = vmatprep.subr.mxu0 0.0
      %535 = vmatpush1.msra.mxu0 %v486
      %536 = vmatprep.subr.mxu0 0.0
      %537 = vmatpush1.msra.mxu0 %v485
      %538 = vmatprep.subr.mxu0 0.0
      %539 = vmatpush1.msra.mxu0 %v484
      %540 = vmatprep.subr.mxu0 0.0
      %541 = vmatpush1.msra.mxu0 %v483
      %542 = vmatprep.subr.mxu0 0.0
      %543 = vmatpush1.msra.mxu0 %v482
      %544 = vmatprep.subr.mxu0 0.0
      %545 = vmatpush1.msra.mxu0 %v481
      %546 = vmatprep.subr.mxu0 0.0
      %547 = vmatpush2.msra.mxu0 0.0
      %548 = vmatprep.subr.mxu0 0.0
      %549 = vmatpush2.msra.mxu0 0.0
      %550 = vmatprep.subr.mxu0 0.0
      %551 = vmatpush2.msra.mxu0 0.0
      %552 = vmatprep.subr.mxu0 0.0
      %553 = vmatpush2.msra.mxu0 0.0
      %554 = vmatprep.subr.mxu0 0.0
      %555 = vmatpush2.msra.mxu0 0.0
      %556 = vmatprep.subr.mxu0 0.0
      %557 = vmatpush2.msra.mxu0 0.0
      %558 = vmatprep.subr.mxu0 0.0
      %559 = vmatpush2.msra.mxu0 0.0
      %560 = vmatprep.subr.mxu0 0.0
      %561 = vmatpush2.msra.mxu0 0.0
      %562 = vmatprep.subr.mxu0 0.0
      %563 = vmatpush2.msra.mxu0 0.0
      %564 = vmatprep.subr.mxu0 0.0
      %565 = vmatpush2.msra.mxu0 0.0
      %566 = vmatprep.subr.mxu0 0.0
      %567 = vmatpush2.msra.mxu0 0.0
      %568 = vmatprep.subr.mxu0 0.0
      %569 = vmatpush2.msra.mxu0 0.0
      %570 = vmatprep.subr.mxu0 0.0
      %571 = vmatpush2.msra.mxu0 0.0
      %572 = vmatprep.subr.mxu0 0.0
      %573 = vmatpush2.msra.mxu0 0.0
      %574 = vmatprep.subr.mxu0 0.0
      %575 = vmatpush2.msra.mxu0 0.0
      %576 = vmatprep.subr.mxu0 0.0
      %577 = vmatpush2.msra.mxu0 0.0
      %578 = vmatprep.mubr.f32.mxu0 0.0
      %579 = vmatmul.mubr.f32.gmra.mxu0 %v491
      %v580 = vpop.f32.mrf.mxu0
      %v581 = vadd.f32 0.0, %v580
      %v582 = vpop.f32.mrf.mxu0
      %583 = vmatprep.mubr.f32.mxu0 0.0
      %584 = vmatmul.mubr.f32.gmra.mxu0 %v494
      %v585 = vpop.f32.mrf.mxu0
      %v586 = vadd.f32 0.0, %v585
      %v587 = vpop.f32.mrf.mxu0
      %588 = vmatprep.mubr.f32.mxu0 0.0
      %589 = vmatmul.mubr.f32.gmra.mxu0 %v497
      %v590 = vpop.f32.mrf.mxu0
      %v591 = vadd.f32 0.0, %v590
      %v592 = vpop.f32.mrf.mxu0
      %593 = vmatprep.mubr.f32.mxu0 0.0
      %594 = vmatmul.mubr.f32.gmra.mxu0 %v500
      %v595 = vpop.f32.mrf.mxu0
      %v596 = vadd.f32 0.0, %v595
      %v597 = vpop.f32.mrf.mxu0
      %598 = vmatprep.mubr.f32.mxu0 0.0
      %599 = vmatmul.mubr.f32.gmra.mxu0 %v503
      %v600 = vpop.f32.mrf.mxu0
      %v601 = vadd.f32 0.0, %v600
      %v602 = vpop.f32.mrf.mxu0
      %603 = vmatprep.mubr.f32.mxu0 0.0
      %604 = vmatmul.mubr.f32.gmra.mxu0 %v506
      %v605 = vpop.f32.mrf.mxu0
      %v606 = vadd.f32 0.0, %v605
      %v607 = vpop.f32.mrf.mxu0
      %608 = vmatprep.mubr.f32.mxu0 0.0
      %609 = vmatmul.mubr.f32.gmra.mxu0 %v509
      %v610 = vpop.f32.mrf.mxu0
      %v611 = vadd.f32 0.0, %v610
      %v612 = vpop.f32.mrf.mxu0
      %613 = vmatprep.mubr.f32.mxu0 0.0
      %614 = vmatmul.mubr.f32.gmra.mxu0 %v512
      %v615 = vpop.f32.mrf.mxu0
      %v616 = vadd.f32 0.0, %v615
      %v617 = vpop.f32.mrf.mxu0
      %618 = vdwg.mxu0
      %619 = vst.msk [vmem:[%s194] sm:$0xff] %vm489, %v581
      %620 = vst.msk [vmem:[%s194 + $0x8] sm:$0xff] %vm489, %v586
      %621 = vst.msk [vmem:[%s194 + $0x10] sm:$0xff] %vm489, %v591
      %622 = vst.msk [vmem:[%s194 + $0x18] sm:$0xff] %vm489, %v596
      %623 = vst.msk [vmem:[%s194 + $0x20] sm:$0xff] %vm489, %v601
      %624 = vst.msk [vmem:[%s194 + $0x28] sm:$0xff] %vm489, %v606
      %625 = vst.msk [vmem:[%s194 + $0x30] sm:$0xff] %vm489, %v611
      %626 = vst.msk [vmem:[%s194 + $0x38] sm:$0xff] %vm489, %v616
      %p627 = scmp.lt.s32.totalorder %s17, 1
      %s628 = scalar_select %p627, %s17, 1
      %p629 = scmp.lt.s32.totalorder %s18, 0
      %s630 = scalar_select %p629, %s18, 0
      %s631 = smul.addr %s628, 8
      %s632 = sadd.s32 %s630, %s631
      %s633 = smul.addr %s632, 8
      %s634 = scalar_lea.vmem %s2, %s633
      // Predicated region
      $region33: #{_lambda_.5} parent=27 // pred_check
        %p635 = pneg %p99
      $region34: #{_lambda_.5} parent=27 // pred_check_branch
        %637 = sbr.rel (%p635) target = $region36
      $region35: #{_lambda_.5} parent=27 // pred_region
        _
      $region36: #{_lambda_.5} parent=27 // pred_fallthru
        _
    $region28: #{_lambda_.5} parent=5 // pred_fallthru
      _
    %p638 = scmp.le.s32.totalorder 2, %s8
    // Predicated region
    $region37: #{_lambda_.5} parent=5 // pred_check
      %p639 = pneg %p638
    $region38: #{_lambda_.5} parent=5 // pred_check_branch
      %641 = sbr.rel (%p639) target = $region40
    $region39: #{_lambda_.5} parent=5 // pred_region
      %s642 = ssub.s32 %s8, 2
      // Predicated region
      $region41: #{_lambda_.5} parent=39 // pred_check
        %p643 = pneg %p105
      $region42: #{_lambda_.5} parent=39 // pred_check_branch
        %645 = sbr.rel (%p643) target = $region44
      $region43: #{_lambda_.5} parent=39 // pred_region
        %p646 = scmp.lt.s32.totalorder %s19, 1
        %s647 = scalar_select %p646, %s19, 1
        %p648 = scmp.lt.s32.totalorder %s20, 0
        %s649 = scalar_select %p648, %s20, 0
        %s650 = smul.addr %s647, 8
        %s651 = sadd.s32 %s649, %s650
        %s652 = smul.addr %s651, 8
        %s653 = scalar_lea.vmem %s2, %s652
      $region44: #{_lambda_.5} parent=39 // pred_fallthru
        _
    $region40: #{_lambda_.5} parent=5 // pred_fallthru
      _
  $region6: #{_lambda_.5} parent=0 // loop_footer
    %s12 = sadd.s32 1, %s8
  $region7: #{_lambda_.5} parent=0 // loop_footer_branch
    %7 = sbr.rel target = $region3
  $region8: #{_lambda_.5} parent=0 // loop_exit
    _

</llo_original>
